<compile_context>
chip_gen: v6e
topology: v6e:2x2x1
jax: 0.10.0
libtpu: 0.0.40
codegen_flags: <defaults>
</compile_context>

<pallas_src>
import functools

import jax
import jax.numpy as jnp
from jax import lax
from jax.experimental import pallas as pl
from jax.experimental.pallas import tpu as pltpu


# ------------------------------ fused Pallas kernel ------------------------------ #

def _graph_conv_block_kernel(x_ref, lbd_ref,
                             w_init_ref, b_init_ref,
                             w_res_ref, b_res_ref,
                             w_final_ref, b_final_ref,
                             y2_ref, y_ref, *, num_blocks):
    """One batch tile (TB samples flattened to M = TB*V rows).

    init ChebConv -> num_blocks residual blocks -> final ChebConv, all sharing the
    same block-diagonal bf16 L_hat, which stays VMEM-resident for the whole chain.
    """
    lbd = lbd_ref[...]                                   # [M, M] bf16

    def cheb(x_f32, w0_bf, w1_bf, bias_f32, relu):
        # ChebConv K=2 (lambda_max fixed, see build_cheb_lhat):
        #   out = x @ W0 + L_hat @ (x @ W1) + b
        # Associativity avoids the lane-sparse L_hat@x intermediate for Cin<128 and
        # the two dots accumulate directly in f32 -- no lane-dim concatenate copy.
        x_bf = x_f32.astype(jnp.bfloat16)
        t0 = jnp.dot(x_bf, w0_bf, preferred_element_type=jnp.float32)
        t1 = jnp.dot(x_bf, w1_bf, preferred_element_type=jnp.float32)
        out = t0 + jnp.dot(lbd, t1.astype(jnp.bfloat16),
                           preferred_element_type=jnp.float32)
        out = out + bias_f32                              # f32 epilogue (VPU filler)
        return jnp.maximum(out, 0.0) if relu else out

    w_init = w_init_ref[...]                              # [2, Cin, H] bf16
    y = cheb(x_ref[...], w_init[0], w_init[1], b_init_ref[...], True)

    def res_body(i, y):
        # dynamic weight indexing keeps vreg live ranges bounded to one layer
        wa = w_res_ref[2 * i]                             # [2, H, H] bf16
        h = cheb(y, wa[0], wa[1], b_res_ref[2 * i], True)
        wb = w_res_ref[2 * i + 1]
        h = cheb(h, wb[0], wb[1], b_res_ref[2 * i + 1], True)
        return (y + h) * 0.5                              # fused residual epilogue

    y = lax.fori_loop(0, num_blocks, res_body, y)

    w_final = w_final_ref[...]                            # [2, H, Cout_p] bf16
    y2 = cheb(y, w_final[0], w_final[1], b_final_ref[...], False)

    y_ref[...] = y
    y2_ref[...] = y2


# ---------------------------------- wrapper --------------------------------------- #

def _pick_batch_tile(b, v, max_m=1024):
    """Largest TB dividing B with TB*V <= max_m (keeps block-diag L_hat small) and a
    sublane-aligned row tile."""
    for cand in range(b, 0, -1):
        m = cand * v
        if b % cand == 0 and m <= max_m and (cand == b or m % 8 == 0):
            return cand
    return 1


def graph_conv_block(x, lhat, params, *, num_blocks=3):
    """x: [B, V, Cin], lhat: [V, V] -> (y2: [B, V, Cout], y: [B, V, hidden])."""
    b, v, cin = x.shape
    hidden = params["w_init"].shape[-1]
    cout = params["w_final"].shape[-1]
    cout_p = max(128, ((cout + 127) // 128) * 128)        # lane-dense final store

    tb = _pick_batch_tile(b, v)
    n_tiles = b // tb
    m = tb * v

    # ---- host-side prep (inside jit; tiny one-time ops per call) ----
    x_flat = x.reshape(b * v, cin)
    # block-diagonal L_hat for TB samples, pre-cast to bf16 (halves DMA + VMEM).
    # TODO(synk): for large TB*V the dense block-diag L_hat ((TB*V)^2 elements) must
    # instead be tiled over a V grid axis with an accumulator; this design assumes it
    # fits VMEM (TB*V capped at 1024 rows above).
    lbd = jnp.kron(jnp.eye(tb, dtype=lhat.dtype), lhat).astype(jnp.bfloat16)

    w_init = params["w_init"].astype(jnp.bfloat16)         # [2, Cin, H]
    w_res = params["w_res"].astype(jnp.bfloat16)           # [2*NB, 2, H, H]
    w_final = (jnp.zeros((2, hidden, cout_p), jnp.float32)
               .at[:, :, :cout].set(params["w_final"])).astype(jnp.bfloat16)
    b_init = params["b_init"]                               # biases stay f32
    b_res = params["b_res"]
    b_final = jnp.zeros((1, cout_p), jnp.float32).at[:, :cout].set(params["b_final"])

    def invariant_spec(arr):
        # grid-invariant operand: constant index_map (DMA'd once); single-buffer it
        # when the grid actually revisits, saving the default 2x VMEM reservation.
        rank = arr.ndim
        idx = lambda i, _r=rank: (0,) * _r
        if n_tiles > 1:
            return pl.BlockSpec(arr.shape, idx, pipeline_mode=pl.Buffered(1))
        return pl.BlockSpec(arr.shape, idx)

    kern = functools.partial(_graph_conv_block_kernel, num_blocks=num_blocks)

    # advisory cost estimate (x@W0 + x@W1 + L@(x@W1) per layer, per batch tile)
    layer_dims = ([(cin, hidden)] + [(hidden, hidden)] * (2 * num_blocks)
                  + [(hidden, cout_p)])
    flops = n_tiles * sum(4 * m * ci * co + 2 * m * m * co for ci, co in layer_dims)
    bytes_accessed = (4 * x_flat.size + 2 * lbd.size
                      + 2 * (w_init.size + w_res.size + w_final.size)
                      + 4 * (b_init.size + b_res.size + b_final.size)
                      + 4 * b * v * (cout_p + hidden))

    grid_spec = pltpu.PrefetchScalarGridSpec(
        num_scalar_prefetch=0,
        grid=(n_tiles,),
        in_specs=[
            pl.BlockSpec((m, cin), lambda i: (i, 0)),       # x, one batch tile / step
            invariant_spec(lbd),                            # shared block-diag L_hat
            invariant_spec(w_init), invariant_spec(b_init),
            invariant_spec(w_res), invariant_spec(b_res),
            invariant_spec(w_final), invariant_spec(b_final),
        ],
        out_specs=[
            pl.BlockSpec((m, cout_p), lambda i: (i, 0)),     # y2 (padded, lane-dense)
            pl.BlockSpec((m, hidden), lambda i: (i, 0)),     # y
        ],
    )

    y2_flat, y_flat = pl.pallas_call(
        kern,
        out_shape=(jax.ShapeDtypeStruct((b * v, cout_p), jnp.float32),
                   jax.ShapeDtypeStruct((b * v, hidden), jnp.float32)),
        grid_spec=grid_spec,
        compiler_params=pltpu.CompilerParams(
            # Batched (typically single-step) grid: nothing to shard; a "parallel"
            # batch split on v7x megacore would only duplicate the weight/L_hat DMA
            # in this DMA/overhead-bound regime.
            dimension_semantics=("arbitrary",),
            vmem_limit_bytes=32 * 1024 * 1024),
        cost_estimate=pl.CostEstimate(flops=flops, transcendentals=0,
                                      bytes_accessed=bytes_accessed),
    )(x_flat, lbd, w_init, b_init, w_res, b_res, w_final, b_final)

    y2 = y2_flat[:, :cout].reshape(b, v, cout)
    y = y_flat.reshape(b, v, hidden)
    return y2, y


# ------------------------------ graph operator glue ------------------------------ #

def build_cheb_lhat(edge_index, num_nodes, normalization=None):
    """Dense scaled Chebyshev Laplacian L_hat = 2*L/lambda_max - I (K=2 operator).
    Duplicate edges are scatter-summed (add aggregation)."""
    src, dst = edge_index[0], edge_index[1]
    not_self = (src != dst).astype(jnp.float32)
    adj = jnp.zeros((num_nodes, num_nodes), jnp.float32).at[dst, src].add(not_self)
    deg = adj.sum(axis=1)
    if normalization == "sym":
        # L = I - D^-1/2 A D^-1/2, lambda_max = 2  ->  L_hat = -D^-1/2 A D^-1/2
        dinv = jnp.where(deg > 0, 1.0 / jnp.sqrt(jnp.maximum(deg, 1e-12)), 0.0)
        return -(dinv[:, None] * adj * dinv[None, :])
    # TODO(synk): PyG ChebConv(normalization=None) requires an explicit lambda_max at
    # forward time; we fix lambda_max = 2.0  ->  L_hat = (D - A) - I.
    return jnp.diag(deg - 1.0) - adj


# ---------------------------------- parameters ----------------------------------- #

def _init_cheb(key, cin, cout):
    """ChebConv(K=2) params: W of shape [2, Cin, Cout] (theta_0, theta_1), bias zeros."""
    k0, k1 = jax.random.split(key)
    limit = (6.0 / (cin + cout)) ** 0.5
    w0 = jax.random.uniform(k0, (cin, cout), jnp.float32, -limit, limit)
    w1 = jax.random.uniform(k1, (cin, cout), jnp.float32, -limit, limit)
    return jnp.stack([w0, w1]), jnp.zeros((1, cout), jnp.float32)


def init_graph_conv_block(key, cin, hidden, cout, num_blocks=3):
    keys = jax.random.split(key, 2 + 2 * num_blocks)
    w_init, b_init = _init_cheb(keys[0], cin, hidden)
    w_res, b_res = [], []
    for i in range(num_blocks):
        w0, b0 = _init_cheb(keys[1 + 2 * i], hidden, hidden)
        w1, b1 = _init_cheb(keys[2 + 2 * i], hidden, hidden)
        w_res += [w0, w1]
        b_res += [b0, b1]
    w_final, b_final = _init_cheb(keys[-1], hidden, cout)
    return dict(w_init=w_init, b_init=b_init,
                w_res=jnp.stack(w_res), b_res=jnp.stack(b_res),
                w_final=w_final, b_final=b_final)


# ----------------------------- pure-JAX reference -------------------------------- #

def _cheb_ref(x, lhat_bf, w, bias, relu):
    xb = x.astype(jnp.bfloat16)
    wb = w.astype(jnp.bfloat16)
    t0 = jnp.dot(xb, wb[0], preferred_element_type=jnp.float32)
    t1 = jnp.dot(xb, wb[1], preferred_element_type=jnp.float32)
    out = t0 + jnp.dot(lhat_bf, t1.astype(jnp.bfloat16),
                       preferred_element_type=jnp.float32) + bias
    return jnp.maximum(out, 0.0) if relu else out


def graph_conv_block_ref(x, lhat, params, num_blocks=3):
    lhat_bf = lhat.astype(jnp.bfloat16)

    def single(xs):
        y = _cheb_ref(xs, lhat_bf, params["w_init"], params["b_init"], True)
        for i in range(num_blocks):
            h = _cheb_ref(y, lhat_bf, params["w_res"][2 * i], params["b_res"][2 * i], True)
            h = _cheb_ref(h, lhat_bf, params["w_res"][2 * i + 1], params["b_res"][2 * i + 1], True)
            y = (y + h) * 0.5
        y2 = _cheb_ref(y, lhat_bf, params["w_final"], params["b_final"], False)
        return y2, y

    return jax.vmap(single)(x)


# ------------------------------------- main --------------------------------------- #

if __name__ == "__main__":
    key = jax.random.PRNGKey(0)
    k_param, k_x = jax.random.split(key)

    B, V = 2, 64
    IN_CH, HIDDEN, OUT_CH, NUM_BLOCKS = 16, 128, 3, 3

    # node features [B, V, Cin]
    x = jax.random.normal(k_x, (B, V, IN_CH), jnp.float32)

    # undirected ring graph over the V vertices (both edge directions present)
    ring = jnp.arange(V, dtype=jnp.int32)
    src = jnp.concatenate([ring, (ring + 1) % V])
    dst = jnp.concatenate([(ring + 1) % V, ring])
    edge_index = jnp.stack([src, dst])

    lhat = build_cheb_lhat(edge_index, V, normalization=None)
    params = init_graph_conv_block(k_param, IN_CH, HIDDEN, OUT_CH, NUM_BLOCKS)

    fwd = jax.jit(functools.partial(graph_conv_block, num_blocks=NUM_BLOCKS))
    y2, y = fwd(x, lhat, params)
    jax.block_until_ready((y2, y))

    assert y2.shape == (B, V, OUT_CH), y2.shape
    assert y.shape == (B, V, HIDDEN), y.shape
    assert bool(jnp.all(jnp.isfinite(y2))) and bool(jnp.all(jnp.isfinite(y)))

    y2_ref, y_ref = graph_conv_block_ref(x, lhat, params, NUM_BLOCKS)
    assert jnp.allclose(y2, y2_ref, rtol=1e-2, atol=1e-2)
    assert jnp.allclose(y, y_ref, rtol=1e-2, atol=1e-2)

    print("KERNEL_OK")
</pallas_src>

<mosaic_0001>
module attributes {stable_mosaic.version = 11 : i64} {
  func.func @_graph_conv_block_kernel(%arg0: i32, %arg1: memref<128x16xf32, #tpu.memory_space<vmem>>, %arg2: memref<128x128xbf16, #tpu.memory_space<vmem>>, %arg3: memref<2x16x128xbf16, #tpu.memory_space<vmem>>, %arg4: memref<1x128xf32, #tpu.memory_space<vmem>>, %arg5: memref<6x2x128x128xbf16, #tpu.memory_space<vmem>>, %arg6: memref<6x1x128xf32, #tpu.memory_space<vmem>>, %arg7: memref<2x128x128xbf16, #tpu.memory_space<vmem>>, %arg8: memref<1x128xf32, #tpu.memory_space<vmem>>, %arg9: memref<128x128xf32, #tpu.memory_space<vmem>>, %arg10: memref<128x128xf32, #tpu.memory_space<vmem>>) attributes {dimension_semantics = [#tpu.dimension_semantics<arbitrary>], iteration_bounds = array<i64: 1>, scalar_prefetch = 0 : i64, scratch_operands = 0 : i64, tpu.core_type = #tpu.core_type<tc>, window_params = [{transform_indices = @transform_0, window_bounds = array<i64: 128, 16>}, {pipeline_mode = #tpu.pipeline_mode<synchronous>, transform_indices = @transform_1, window_bounds = array<i64: 128, 128>}, {pipeline_mode = #tpu.pipeline_mode<synchronous>, transform_indices = @transform_2, window_bounds = array<i64: 2, 16, 128>}, {pipeline_mode = #tpu.pipeline_mode<synchronous>, transform_indices = @transform_3, window_bounds = array<i64: 1, 128>}, {pipeline_mode = #tpu.pipeline_mode<synchronous>, transform_indices = @transform_4, window_bounds = array<i64: 6, 2, 128, 128>}, {pipeline_mode = #tpu.pipeline_mode<synchronous>, transform_indices = @transform_5, window_bounds = array<i64: 6, 1, 128>}, {pipeline_mode = #tpu.pipeline_mode<synchronous>, transform_indices = @transform_6, window_bounds = array<i64: 2, 128, 128>}, {pipeline_mode = #tpu.pipeline_mode<synchronous>, transform_indices = @transform_7, window_bounds = array<i64: 1, 128>}, {transform_indices = @transform_8, window_bounds = array<i64: 128, 128>}, {transform_indices = @transform_9, window_bounds = array<i64: 128, 128>}]} {
    %c0 = arith.constant 0 : index
    %c0_0 = arith.constant 0 : index
    %0 = vector.load %arg2[%c0, %c0_0] : memref<128x128xbf16, #tpu.memory_space<vmem>>, vector<128x128xbf16>
    %c0_1 = arith.constant 0 : index
    %c0_2 = arith.constant 0 : index
    %c0_3 = arith.constant 0 : index
    %1 = vector.load %arg3[%c0_1, %c0_2, %c0_3] : memref<2x16x128xbf16, #tpu.memory_space<vmem>>, vector<2x16x128xbf16>
    %c0_4 = arith.constant 0 : index
    %c0_5 = arith.constant 0 : index
    %2 = vector.load %arg1[%c0_4, %c0_5] : memref<128x16xf32, #tpu.memory_space<vmem>>, vector<128x16xf32>
    %3 = vector.extract_strided_slice %1 {offsets = [0, 0, 0], sizes = [1, 16, 128], strides = [1, 1, 1]} : vector<2x16x128xbf16> to vector<1x16x128xbf16>
    %4 = vector.shape_cast %3 : vector<1x16x128xbf16> to vector<16x128xbf16>
    %5 = vector.extract_strided_slice %1 {offsets = [1, 0, 0], sizes = [1, 16, 128], strides = [1, 1, 1]} : vector<2x16x128xbf16> to vector<1x16x128xbf16>
    %6 = vector.shape_cast %5 : vector<1x16x128xbf16> to vector<16x128xbf16>
    %c0_6 = arith.constant 0 : index
    %c0_7 = arith.constant 0 : index
    %7 = vector.load %arg4[%c0_6, %c0_7] : memref<1x128xf32, #tpu.memory_space<vmem>>, vector<1x128xf32>
    %8 = arith.truncf %2 : vector<128x16xf32> to vector<128x16xbf16>
    %cst = arith.constant dense<0.000000e+00> : vector<128x128xf32>
    %9 = tpu.matmul %8, %4, %cst {dimension_numbers = #tpu.dot_dimension_numbers<[1], [0], [0], [1], [0, 0, 1, 1], [], []>} : vector<128x16xbf16>, vector<16x128xbf16>, vector<128x128xf32> -> vector<128x128xf32>
    %cst_8 = arith.constant dense<0.000000e+00> : vector<128x128xf32>
    %10 = tpu.matmul %8, %6, %cst_8 {dimension_numbers = #tpu.dot_dimension_numbers<[1], [0], [0], [1], [0, 0, 1, 1], [], []>} : vector<128x16xbf16>, vector<16x128xbf16>, vector<128x128xf32> -> vector<128x128xf32>
    %11 = arith.truncf %10 : vector<128x128xf32> to vector<128x128xbf16>
    %cst_9 = arith.constant dense<0.000000e+00> : vector<128x128xf32>
    %12 = tpu.matmul %0, %11, %cst_9 {dimension_numbers = #tpu.dot_dimension_numbers<[1], [0], [0], [1], [0, 0, 1, 1], [], []>} : vector<128x128xbf16>, vector<128x128xbf16>, vector<128x128xf32> -> vector<128x128xf32>
    %13 = arith.addf %9, %12 : vector<128x128xf32>
    %14 = vector.broadcast %7 : vector<1x128xf32> to vector<128x128xf32>
    %15 = arith.addf %13, %14 : vector<128x128xf32>
    %cst_10 = arith.constant 0.000000e+00 : f32
    %16 = vector.broadcast %cst_10 : f32 to vector<128x128xf32>
    %17 = arith.maximumf %15, %16 : vector<128x128xf32>
    %c0_i32 = arith.constant 0 : i32
    %c3_i32 = arith.constant 3 : i32
    %18 = arith.addi %c0_i32, %c3_i32 : i32
    %c1_i32 = arith.constant 1 : i32
    %19 = scf.for %arg11 = %c0_i32 to %18 step %c1_i32 iter_args(%arg12 = %17) -> (vector<128x128xf32>)  : i32 {
      %c2_i32 = arith.constant 2 : i32
      %36 = arith.muli %c2_i32, %arg11 : i32
      %37 = arith.index_cast %36 : i32 to index
      %c0_24 = arith.constant 0 : index
      %c0_25 = arith.constant 0 : index
      %c0_26 = arith.constant 0 : index
      %38 = vector.load %arg5[%37, %c0_24, %c0_25, %c0_26] : memref<6x2x128x128xbf16, #tpu.memory_space<vmem>>, vector<1x2x128x128xbf16>
      %39 = vector.shape_cast %38 : vector<1x2x128x128xbf16> to vector<2x128x128xbf16>
      %40 = vector.extract_strided_slice %39 {offsets = [0, 0, 0], sizes = [1, 128, 128], strides = [1, 1, 1]} : vector<2x128x128xbf16> to vector<1x128x128xbf16>
      %41 = vector.shape_cast %40 : vector<1x128x128xbf16> to vector<128x128xbf16>
      %42 = vector.extract_strided_slice %39 {offsets = [1, 0, 0], sizes = [1, 128, 128], strides = [1, 1, 1]} : vector<2x128x128xbf16> to vector<1x128x128xbf16>
      %43 = vector.shape_cast %42 : vector<1x128x128xbf16> to vector<128x128xbf16>
      %c2_i32_27 = arith.constant 2 : i32
      %44 = arith.muli %c2_i32_27, %arg11 : i32
      %45 = arith.index_cast %44 : i32 to index
      %c0_28 = arith.constant 0 : index
      %c0_29 = arith.constant 0 : index
      %46 = vector.load %arg6[%45, %c0_28, %c0_29] : memref<6x1x128xf32, #tpu.memory_space<vmem>>, vector<1x1x128xf32>
      %47 = vector.shape_cast %46 : vector<1x1x128xf32> to vector<1x128xf32>
      %48 = arith.truncf %arg12 : vector<128x128xf32> to vector<128x128xbf16>
      %cst_30 = arith.constant dense<0.000000e+00> : vector<128x128xf32>
      %49 = tpu.matmul %48, %41, %cst_30 {dimension_numbers = #tpu.dot_dimension_numbers<[1], [0], [0], [1], [0, 0, 1, 1], [], []>} : vector<128x128xbf16>, vector<128x128xbf16>, vector<128x128xf32> -> vector<128x128xf32>
      %cst_31 = arith.constant dense<0.000000e+00> : vector<128x128xf32>
      %50 = tpu.matmul %48, %43, %cst_31 {dimension_numbers = #tpu.dot_dimension_numbers<[1], [0], [0], [1], [0, 0, 1, 1], [], []>} : vector<128x128xbf16>, vector<128x128xbf16>, vector<128x128xf32> -> vector<128x128xf32>
      %51 = arith.truncf %50 : vector<128x128xf32> to vector<128x128xbf16>
      %cst_32 = arith.constant dense<0.000000e+00> : vector<128x128xf32>
      %52 = tpu.matmul %0, %51, %cst_32 {dimension_numbers = #tpu.dot_dimension_numbers<[1], [0], [0], [1], [0, 0, 1, 1], [], []>} : vector<128x128xbf16>, vector<128x128xbf16>, vector<128x128xf32> -> vector<128x128xf32>
      %53 = arith.addf %49, %52 : vector<128x128xf32>
      %54 = vector.broadcast %47 : vector<1x128xf32> to vector<128x128xf32>
      %55 = arith.addf %53, %54 : vector<128x128xf32>
      %cst_33 = arith.constant 0.000000e+00 : f32
      %56 = vector.broadcast %cst_33 : f32 to vector<128x128xf32>
      %57 = arith.maximumf %55, %56 : vector<128x128xf32>
      %c2_i32_34 = arith.constant 2 : i32
      %58 = arith.muli %c2_i32_34, %arg11 : i32
      %c1_i32_35 = arith.constant 1 : i32
      %59 = arith.addi %58, %c1_i32_35 : i32
      %60 = arith.index_cast %59 : i32 to index
      %c0_36 = arith.constant 0 : index
      %c0_37 = arith.constant 0 : index
      %c0_38 = arith.constant 0 : index
      %61 = vector.load %arg5[%60, %c0_36, %c0_37, %c0_38] : memref<6x2x128x128xbf16, #tpu.memory_space<vmem>>, vector<1x2x128x128xbf16>
      %62 = vector.shape_cast %61 : vector<1x2x128x128xbf16> to vector<2x128x128xbf16>
      %63 = vector.extract_strided_slice %62 {offsets = [0, 0, 0], sizes = [1, 128, 128], strides = [1, 1, 1]} : vector<2x128x128xbf16> to vector<1x128x128xbf16>
      %64 = vector.shape_cast %63 : vector<1x128x128xbf16> to vector<128x128xbf16>
      %65 = vector.extract_strided_slice %62 {offsets = [1, 0, 0], sizes = [1, 128, 128], strides = [1, 1, 1]} : vector<2x128x128xbf16> to vector<1x128x128xbf16>
      %66 = vector.shape_cast %65 : vector<1x128x128xbf16> to vector<128x128xbf16>
      %c2_i32_39 = arith.constant 2 : i32
      %67 = arith.muli %c2_i32_39, %arg11 : i32
      %c1_i32_40 = arith.constant 1 : i32
      %68 = arith.addi %67, %c1_i32_40 : i32
      %69 = arith.index_cast %68 : i32 to index
      %c0_41 = arith.constant 0 : index
      %c0_42 = arith.constant 0 : index
      %70 = vector.load %arg6[%69, %c0_41, %c0_42] : memref<6x1x128xf32, #tpu.memory_space<vmem>>, vector<1x1x128xf32>
      %71 = vector.shape_cast %70 : vector<1x1x128xf32> to vector<1x128xf32>
      %72 = arith.truncf %57 : vector<128x128xf32> to vector<128x128xbf16>
      %cst_43 = arith.constant dense<0.000000e+00> : vector<128x128xf32>
      %73 = tpu.matmul %72, %64, %cst_43 {dimension_numbers = #tpu.dot_dimension_numbers<[1], [0], [0], [1], [0, 0, 1, 1], [], []>} : vector<128x128xbf16>, vector<128x128xbf16>, vector<128x128xf32> -> vector<128x128xf32>
      %cst_44 = arith.constant dense<0.000000e+00> : vector<128x128xf32>
      %74 = tpu.matmul %72, %66, %cst_44 {dimension_numbers = #tpu.dot_dimension_numbers<[1], [0], [0], [1], [0, 0, 1, 1], [], []>} : vector<128x128xbf16>, vector<128x128xbf16>, vector<128x128xf32> -> vector<128x128xf32>
      %75 = arith.truncf %74 : vector<128x128xf32> to vector<128x128xbf16>
      %cst_45 = arith.constant dense<0.000000e+00> : vector<128x128xf32>
      %76 = tpu.matmul %0, %75, %cst_45 {dimension_numbers = #tpu.dot_dimension_numbers<[1], [0], [0], [1], [0, 0, 1, 1], [], []>} : vector<128x128xbf16>, vector<128x128xbf16>, vector<128x128xf32> -> vector<128x128xf32>
      %77 = arith.addf %73, %76 : vector<128x128xf32>
      %78 = vector.broadcast %71 : vector<1x128xf32> to vector<128x128xf32>
      %79 = arith.addf %77, %78 : vector<128x128xf32>
      %cst_46 = arith.constant 0.000000e+00 : f32
      %80 = vector.broadcast %cst_46 : f32 to vector<128x128xf32>
      %81 = arith.maximumf %79, %80 : vector<128x128xf32>
      %82 = arith.addf %arg12, %81 : vector<128x128xf32>
      %cst_47 = arith.constant 5.000000e-01 : f32
      %83 = vector.broadcast %cst_47 : f32 to vector<128x128xf32>
      %84 = arith.mulf %82, %83 : vector<128x128xf32>
      scf.yield %84 : vector<128x128xf32>
    }
    %c3_i32_11 = arith.constant 3 : i32
    %c0_12 = arith.constant 0 : index
    %c0_13 = arith.constant 0 : index
    %c0_14 = arith.constant 0 : index
    %20 = vector.load %arg7[%c0_12, %c0_13, %c0_14] : memref<2x128x128xbf16, #tpu.memory_space<vmem>>, vector<2x128x128xbf16>
    %21 = vector.extract_strided_slice %20 {offsets = [0, 0, 0], sizes = [1, 128, 128], strides = [1, 1, 1]} : vector<2x128x128xbf16> to vector<1x128x128xbf16>
    %22 = vector.shape_cast %21 : vector<1x128x128xbf16> to vector<128x128xbf16>
    %23 = vector.extract_strided_slice %20 {offsets = [1, 0, 0], sizes = [1, 128, 128], strides = [1, 1, 1]} : vector<2x128x128xbf16> to vector<1x128x128xbf16>
    %24 = vector.shape_cast %23 : vector<1x128x128xbf16> to vector<128x128xbf16>
    %c0_15 = arith.constant 0 : index
    %c0_16 = arith.constant 0 : index
    %25 = vector.load %arg8[%c0_15, %c0_16] : memref<1x128xf32, #tpu.memory_space<vmem>>, vector<1x128xf32>
    %26 = arith.truncf %19 : vector<128x128xf32> to vector<128x128xbf16>
    %cst_17 = arith.constant dense<0.000000e+00> : vector<128x128xf32>
    %27 = tpu.matmul %26, %22, %cst_17 {dimension_numbers = #tpu.dot_dimension_numbers<[1], [0], [0], [1], [0, 0, 1, 1], [], []>} : vector<128x128xbf16>, vector<128x128xbf16>, vector<128x128xf32> -> vector<128x128xf32>
    %cst_18 = arith.constant dense<0.000000e+00> : vector<128x128xf32>
    %28 = tpu.matmul %26, %24, %cst_18 {dimension_numbers = #tpu.dot_dimension_numbers<[1], [0], [0], [1], [0, 0, 1, 1], [], []>} : vector<128x128xbf16>, vector<128x128xbf16>, vector<128x128xf32> -> vector<128x128xf32>
    %29 = arith.truncf %28 : vector<128x128xf32> to vector<128x128xbf16>
    %cst_19 = arith.constant dense<0.000000e+00> : vector<128x128xf32>
    %30 = tpu.matmul %0, %29, %cst_19 {dimension_numbers = #tpu.dot_dimension_numbers<[1], [0], [0], [1], [0, 0, 1, 1], [], []>} : vector<128x128xbf16>, vector<128x128xbf16>, vector<128x128xf32> -> vector<128x128xf32>
    %31 = arith.addf %27, %30 : vector<128x128xf32>
    %32 = vector.broadcast %25 : vector<1x128xf32> to vector<128x128xf32>
    %33 = arith.addf %31, %32 : vector<128x128xf32>
    %c0_20 = arith.constant 0 : index
    %c0_21 = arith.constant 0 : index
    %34 = vector.load %arg10[%c0_20, %c0_21] : memref<128x128xf32, #tpu.memory_space<vmem>>, vector<128x128xf32>
    tpu.vector_store %arg10[%c0_20, %c0_21], %19 {strides = array<i32>} : memref<128x128xf32, #tpu.memory_space<vmem>>, vector<128x128xf32>,
    %c0_22 = arith.constant 0 : index
    %c0_23 = arith.constant 0 : index
    %35 = vector.load %arg9[%c0_22, %c0_23] : memref<128x128xf32, #tpu.memory_space<vmem>>, vector<128x128xf32>
    tpu.vector_store %arg9[%c0_22, %c0_23], %33 {strides = array<i32>} : memref<128x128xf32, #tpu.memory_space<vmem>>, vector<128x128xf32>,
    return
  }
  func.func @transform_0(%arg0: i32) -> (i32, i32) {
    %c0_i32 = arith.constant 0 : i32
    %c0_i32_0 = arith.constant 0 : i32
    return %arg0, %c0_i32 : i32, i32
  }
  func.func @transform_1(%arg0: i32) -> (i32, i32) {
    %c0_i32 = arith.constant 0 : i32
    %c0_i32_0 = arith.constant 0 : i32
    %c0_i32_1 = arith.constant 0 : i32
    return %c0_i32, %c0_i32_0 : i32, i32
  }
  func.func @transform_2(%arg0: i32) -> (i32, i32, i32) {
    %c0_i32 = arith.constant 0 : i32
    %c0_i32_0 = arith.constant 0 : i32
    %c0_i32_1 = arith.constant 0 : i32
    %c0_i32_2 = arith.constant 0 : i32
    return %c0_i32, %c0_i32_0, %c0_i32_1 : i32, i32, i32
  }
  func.func @transform_3(%arg0: i32) -> (i32, i32) {
    %c0_i32 = arith.constant 0 : i32
    %c0_i32_0 = arith.constant 0 : i32
    %c0_i32_1 = arith.constant 0 : i32
    return %c0_i32, %c0_i32_0 : i32, i32
  }
  func.func @transform_4(%arg0: i32) -> (i32, i32, i32, i32) {
    %c0_i32 = arith.constant 0 : i32
    %c0_i32_0 = arith.constant 0 : i32
    %c0_i32_1 = arith.constant 0 : i32
    %c0_i32_2 = arith.constant 0 : i32
    %c0_i32_3 = arith.constant 0 : i32
    return %c0_i32, %c0_i32_0, %c0_i32_1, %c0_i32_2 : i32, i32, i32, i32
  }
  func.func @transform_5(%arg0: i32) -> (i32, i32, i32) {
    %c0_i32 = arith.constant 0 : i32
    %c0_i32_0 = arith.constant 0 : i32
    %c0_i32_1 = arith.constant 0 : i32
    %c0_i32_2 = arith.constant 0 : i32
    return %c0_i32, %c0_i32_0, %c0_i32_1 : i32, i32, i32
  }
  func.func @transform_6(%arg0: i32) -> (i32, i32, i32) {
    %c0_i32 = arith.constant 0 : i32
    %c0_i32_0 = arith.constant 0 : i32
    %c0_i32_1 = arith.constant 0 : i32
    %c0_i32_2 = arith.constant 0 : i32
    return %c0_i32, %c0_i32_0, %c0_i32_1 : i32, i32, i32
  }
  func.func @transform_7(%arg0: i32) -> (i32, i32) {
    %c0_i32 = arith.constant 0 : i32
    %c0_i32_0 = arith.constant 0 : i32
    %c0_i32_1 = arith.constant 0 : i32
    return %c0_i32, %c0_i32_0 : i32, i32
  }
  func.func @transform_8(%arg0: i32) -> (i32, i32) {
    %c0_i32 = arith.constant 0 : i32
    %c0_i32_0 = arith.constant 0 : i32
    return %arg0, %c0_i32 : i32, i32
  }
  func.func @transform_9(%arg0: i32) -> (i32, i32) {
    %c0_i32 = arith.constant 0 : i32
    %c0_i32_0 = arith.constant 0 : i32
    return %arg0, %c0_i32 : i32, i32
  }
}

</mosaic_0001>

<llo_original>
// kernel: graph_conv_block.1
$region0: #{graph_conv_block.1}
  #allocation0 [shape = 'u32[]', space=smem, size = 0x4, offset = 0x4, fixed_abs, tag = 'smem constant byte address 0x4 - core index']
  #allocation1 [shape = 'u32[144,128]{1,0:T(1,128)}', space=vmem, size = 0x12000, scoped, tag = 'internal scratch']
  %s0 = inlined_call_operand.vmem [shape: f32[128,16], index: 0, kind: input, shape index: {}]
  %s1 = inlined_call_operand.vmem [shape: bf16[128,128], index: 1, kind: input, shape index: {}]
  %s2 = inlined_call_operand.vmem [shape: bf16[2,16,128], index: 2, kind: input, shape index: {}]
  %s3 = inlined_call_operand.vmem [shape: f32[1,128], index: 3, kind: input, shape index: {}]
  %s4 = inlined_call_operand.vmem [shape: bf16[6,2,128,128], index: 4, kind: input, shape index: {}]
  %s5 = inlined_call_operand.vmem [shape: f32[6,1,128], index: 5, kind: input, shape index: {}]
  %s6 = inlined_call_operand.vmem [shape: bf16[2,128,128], index: 6, kind: input, shape index: {}]
  %s7 = inlined_call_operand.vmem [shape: f32[1,128], index: 7, kind: input, shape index: {}]
  %s8 = inlined_call_operand.vmem [shape: f32[128,128], index: 8, kind: output, shape index: {0}]
  %s9 = inlined_call_operand.hbm [shape: f32[128,128], index: 9, kind: output, shape index: {1}]
  %10 = xla_tuple %s8, %s9
  %s11 = sld [smem:[#allocation0]]
  $region57: #{graph_conv_block.1} parent=0
    _
  %s13 = ssub.s32 1, %s11
  %s14 = scalar_select 0, %s13, %s11
  $region1: #{graph_conv_block.1} parent=0
    #allocation2 [shape = 'u8[65536]{0}', space=vmem, size = 0x10000, scoped, tag = 'output window, operand 1, single buffered']
    #allocation3 [shape = 's32[1]{0}', space=sflag, size = 0x4, scoped, tag = 'scoped memory for graph_conv_block.1']
    %15 = vsyncpa [#allocation3], 0
    // Predicated region
    $region2: #{graph_conv_block.1} parent=1 // pred_check
      _
    $region3: #{graph_conv_block.1} parent=1 // pred_check_branch
      %17 = sbr.rel (0) target = $region5
    $region4: #{graph_conv_block.1} parent=1 // pred_region
      _
    $region5: #{graph_conv_block.1} parent=1 // pred_fallthru
      _
    // Predicated region
    $region6: #{graph_conv_block.1} parent=1 // pred_check
      _
    $region7: #{graph_conv_block.1} parent=1 // pred_check_branch
      %19 = sbr.rel (0) target = $region9
    $region8: #{graph_conv_block.1} parent=1 // pred_region
      _
    $region9: #{graph_conv_block.1} parent=1 // pred_fallthru
      _
    // Predicated region
    $region10: #{graph_conv_block.1} parent=1 // pred_check
      _
    $region11: #{graph_conv_block.1} parent=1 // pred_check_branch
      %21 = sbr.rel (0) target = $region13
    $region12: #{graph_conv_block.1} parent=1 // pred_region
      _
    $region13: #{graph_conv_block.1} parent=1 // pred_fallthru
      _
    // Predicated region
    $region14: #{graph_conv_block.1} parent=1 // pred_check
      _
    $region15: #{graph_conv_block.1} parent=1 // pred_check_branch
      %23 = sbr.rel (0) target = $region17
    $region16: #{graph_conv_block.1} parent=1 // pred_region
      _
    $region17: #{graph_conv_block.1} parent=1 // pred_fallthru
      _
    // Predicated region
    $region18: #{graph_conv_block.1} parent=1 // pred_check
      _
    $region19: #{graph_conv_block.1} parent=1 // pred_check_branch
      %25 = sbr.rel (0) target = $region21
    $region20: #{graph_conv_block.1} parent=1 // pred_region
      _
    $region21: #{graph_conv_block.1} parent=1 // pred_fallthru
      _
    // Predicated region
    $region22: #{graph_conv_block.1} parent=1 // pred_check
      _
    $region23: #{graph_conv_block.1} parent=1 // pred_check_branch
      %27 = sbr.rel (0) target = $region25
    $region24: #{graph_conv_block.1} parent=1 // pred_region
      _
    $region25: #{graph_conv_block.1} parent=1 // pred_fallthru
      _
    // Predicated region
    $region26: #{graph_conv_block.1} parent=1 // pred_check
      _
    $region27: #{graph_conv_block.1} parent=1 // pred_check_branch
      %29 = sbr.rel (0) target = $region29
    $region28: #{graph_conv_block.1} parent=1 // pred_region
      _
    $region29: #{graph_conv_block.1} parent=1 // pred_fallthru
      _
    // Predicated region
    $region30: #{graph_conv_block.1} parent=1 // pred_check
      _
    $region31: #{graph_conv_block.1} parent=1 // pred_check_branch
      %31 = sbr.rel (0) target = $region33
    $region32: #{graph_conv_block.1} parent=1 // pred_region
      _
    $region33: #{graph_conv_block.1} parent=1 // pred_fallthru
      _
    %v33 = vld [vmem:[%s1] sm:$0xf]
    %v34 = vld [vmem:[%s1 + $0x4] sm:$0xf]
    %v35 = vld [vmem:[%s1 + $0x8] sm:$0xf]
    %v36 = vld [vmem:[%s1 + $0xc] sm:$0xf]
    %v37 = vld [vmem:[%s1 + $0x10] sm:$0xf]
    %v38 = vld [vmem:[%s1 + $0x14] sm:$0xf]
    %v39 = vld [vmem:[%s1 + $0x18] sm:$0xf]
    %v40 = vld [vmem:[%s1 + $0x1c] sm:$0xf]
    %v41 = vld [vmem:[%s1 + $0x20] sm:$0xf]
    %v42 = vld [vmem:[%s1 + $0x24] sm:$0xf]
    %v43 = vld [vmem:[%s1 + $0x28] sm:$0xf]
    %v44 = vld [vmem:[%s1 + $0x2c] sm:$0xf]
    %v45 = vld [vmem:[%s1 + $0x30] sm:$0xf]
    %v46 = vld [vmem:[%s1 + $0x34] sm:$0xf]
    %v47 = vld [vmem:[%s1 + $0x38] sm:$0xf]
    %v48 = vld [vmem:[%s1 + $0x3c] sm:$0xf]
    %v49 = vld [vmem:[%s2] sm:$0xf]
    %v50 = vld [vmem:[%s2 + $0x4] sm:$0xf]
    %v51 = vld [vmem:[%s2 + $0x8] sm:$0xf]
    %v52 = vld [vmem:[%s2 + $0xc] sm:$0xf]
    %v53 = vld [vmem:[%s0] sm:$0xff]
    %v54 = vld [vmem:[%s0 + $0x8] sm:$0xff]
    %v55 = vld [vmem:[%s0 + $0x10] sm:$0xff]
    %v56 = vld [vmem:[%s0 + $0x18] sm:$0xff]
    %v57 = vld [vmem:[%s0 + $0x20] sm:$0xff]
    %v58 = vld [vmem:[%s0 + $0x28] sm:$0xff]
    %v59 = vld [vmem:[%s0 + $0x30] sm:$0xff]
    %v60 = vld [vmem:[%s0 + $0x38] sm:$0xff]
    %v61 = vld [vmem:[%s0 + $0x40] sm:$0xff]
    %v62 = vld [vmem:[%s0 + $0x48] sm:$0xff]
    %v63 = vld [vmem:[%s0 + $0x50] sm:$0xff]
    %v64 = vld [vmem:[%s0 + $0x58] sm:$0xff]
    %v65 = vld [vmem:[%s0 + $0x60] sm:$0xff]
    %v66 = vld [vmem:[%s0 + $0x68] sm:$0xff]
    %v67 = vld [vmem:[%s0 + $0x70] sm:$0xff]
    %v68 = vld [vmem:[%s0 + $0x78] sm:$0xff]
    %v69 = vld [vmem:[%s3] sm:$0x1]
    %v70 = vpack.c.bf16 %v54, %v53
    %v71 = vpack.c.bf16 %v56, %v55
    %v72 = vpack.c.bf16 %v58, %v57
    %v73 = vpack.c.bf16 %v60, %v59
    %v74 = vpack.c.bf16 %v62, %v61
    %v75 = vpack.c.bf16 %v64, %v63
    %v76 = vpack.c.bf16 %v66, %v65
    %v77 = vpack.c.bf16 %v68, %v67
    %v80 = vunpack.c.l.b16 %v51
    %v81 = vunpack.c.l.b16 %v52
    %v82 = vpack.c.b16 %v81, %v80
    %vm84 = vcmask 130048
    %v86 = vsel %vm84, %v70, 0
    %v89 = vsel %vm84, %v71, 0
    %v92 = vsel %vm84, %v72, 0
    %v95 = vsel %vm84, %v73, 0
    %v98 = vsel %vm84, %v74, 0
    %v101 = vsel %vm84, %v75, 0
    %v104 = vsel %vm84, %v76, 0
    %v107 = vsel %vm84, %v77, 0
    %109 = vmatprep.subr.bf16.mxu0 0
    %110 = vmatpush1.bf16.msra.mxu0 0
    %111 = vmatprep.subr.bf16.mxu0 0
    %112 = vmatpush1.bf16.msra.mxu0 0
    %113 = vmatprep.subr.bf16.mxu0 0
    %114 = vmatpush1.bf16.msra.mxu0 0
    %115 = vmatprep.subr.bf16.mxu0 0
    %116 = vmatpush1.bf16.msra.mxu0 0
    %117 = vmatprep.subr.bf16.mxu0 0
    %118 = vmatpush1.bf16.msra.mxu0 0
    %119 = vmatprep.subr.bf16.mxu0 0
    %120 = vmatpush1.bf16.msra.mxu0 0
    %121 = vmatprep.subr.bf16.mxu0 0
    %122 = vmatpush1.bf16.msra.mxu0 0
    %123 = vmatprep.subr.bf16.mxu0 0
    %124 = vmatpush1.bf16.msra.mxu0 %v82
    %125 = vmatprep.subr.bf16.mxu0 0
    %126 = vmatpush2.bf16.msra.mxu0 0
    %127 = vmatprep.subr.bf16.mxu0 0
    %128 = vmatpush2.bf16.msra.mxu0 0
    %129 = vmatprep.subr.bf16.mxu0 0
    %130 = vmatpush2.bf16.msra.mxu0 0
    %131 = vmatprep.subr.bf16.mxu0 0
    %132 = vmatpush2.bf16.msra.mxu0 0
    %133 = vmatprep.subr.bf16.mxu0 0
    %134 = vmatpush2.bf16.msra.mxu0 0
    %135 = vmatprep.subr.bf16.mxu0 0
    %136 = vmatpush2.bf16.msra.mxu0 0
    %137 = vmatprep.subr.bf16.mxu0 0
    %138 = vmatpush2.bf16.msra.mxu0 0
    %139 = vmatprep.subr.bf16.mxu0 0
    %140 = vmatpush2.bf16.msra.mxu0 0
    %141 = vmatprep.mubr.bf16.mxu0 0
    %142 = vmatmul.mubr.bf16.gmra.mxu0 %v86
    %v143 = vpop.f32.mrf.mxu0
    %v144 = vadd.f32 0.0, %v143
    %v145 = vpop.f32.mrf.mxu0
    %v146 = vpop.f32.mrf.mxu0
    %v147 = vadd.f32 0.0, %v146
    %v148 = vpop.f32.mrf.mxu0
    %149 = vmatprep.mubr.bf16.mxu0 0
    %150 = vmatmul.mubr.bf16.gmra.mxu0 %v89
    %v151 = vpop.f32.mrf.mxu0
    %v152 = vadd.f32 0.0, %v151
    %v153 = vpop.f32.mrf.mxu0
    %v154 = vpop.f32.mrf.mxu0
    %v155 = vadd.f32 0.0, %v154
    %v156 = vpop.f32.mrf.mxu0
    %157 = vmatprep.mubr.bf16.mxu0 0
    %158 = vmatmul.mubr.bf16.gmra.mxu0 %v92
    %v159 = vpop.f32.mrf.mxu0
    %v160 = vadd.f32 0.0, %v159
    %v161 = vpop.f32.mrf.mxu0
    %v162 = vpop.f32.mrf.mxu0
    %v163 = vadd.f32 0.0, %v162
    %v164 = vpop.f32.mrf.mxu0
    %165 = vmatprep.mubr.bf16.mxu0 0
    %166 = vmatmul.mubr.bf16.gmra.mxu0 %v95
    %v167 = vpop.f32.mrf.mxu0
    %v168 = vadd.f32 0.0, %v167
    %v169 = vpop.f32.mrf.mxu0
    %v170 = vpop.f32.mrf.mxu0
    %v171 = vadd.f32 0.0, %v170
    %v172 = vpop.f32.mrf.mxu0
    %173 = vmatprep.mubr.bf16.mxu0 0
    %174 = vmatmul.mubr.bf16.gmra.mxu0 %v98
    %v175 = vpop.f32.mrf.mxu0
    %v176 = vadd.f32 0.0, %v175
    %v177 = vpop.f32.mrf.mxu0
    %v178 = vpop.f32.mrf.mxu0
    %v179 = vadd.f32 0.0, %v178
    %v180 = vpop.f32.mrf.mxu0
    %181 = vmatprep.mubr.bf16.mxu0 0
    %182 = vmatmul.mubr.bf16.gmra.mxu0 %v101
    %v183 = vpop.f32.mrf.mxu0
    %v184 = vadd.f32 0.0, %v183
    %v185 = vpop.f32.mrf.mxu0
    %v186 = vpop.f32.mrf.mxu0
    %v187 = vadd.f32 0.0, %v186
    %v188 = vpop.f32.mrf.mxu0
    %189 = vmatprep.mubr.bf16.mxu0 0
    %190 = vmatmul.mubr.bf16.gmra.mxu0 %v104
    %v191 = vpop.f32.mrf.mxu0
    %v192 = vadd.f32 0.0, %v191
    %v193 = vpop.f32.mrf.mxu0
    %v194 = vpop.f32.mrf.mxu0
    %v195 = vadd.f32 0.0, %v194
    %v196 = vpop.f32.mrf.mxu0
    %197 = vmatprep.mubr.bf16.mxu0 0
    %198 = vmatmul.mubr.bf16.gmra.mxu0 %v107
    %v199 = vpop.f32.mrf.mxu0
    %v200 = vadd.f32 0.0, %v199
    %v201 = vpop.f32.mrf.mxu0
    %v202 = vpop.f32.mrf.mxu0
    %v203 = vadd.f32 0.0, %v202
    %v204 = vpop.f32.mrf.mxu0
    %205 = vdwg.mxu0
    %v206 = vpack.c.bf16 %v147, %v144
    %v207 = vpack.c.bf16 %v155, %v152
    %v208 = vpack.c.bf16 %v163, %v160
    %v209 = vpack.c.bf16 %v171, %v168
    %v210 = vpack.c.bf16 %v179, %v176
    %v211 = vpack.c.bf16 %v187, %v184
    %v212 = vpack.c.bf16 %v195, %v192
    %v213 = vpack.c.bf16 %v203, %v200
    %v230 = vunpack.c.l.b16 %v33
    %v231 = vunpack.c.l.b16 %v34
    %v232 = vunpack.c.l.b16 %v35
    %v233 = vunpack.c.l.b16 %v36
    %v234 = vunpack.c.l.b16 %v37
    %v235 = vunpack.c.l.b16 %v38
    %v236 = vunpack.c.l.b16 %v39
    %v237 = vunpack.c.l.b16 %v40
    %v238 = vunpack.c.l.b16 %v41
    %v239 = vunpack.c.l.b16 %v42
    %v240 = vunpack.c.l.b16 %v43
    %v241 = vunpack.c.l.b16 %v44
    %v242 = vunpack.c.l.b16 %v45
    %v243 = vunpack.c.l.b16 %v46
    %v244 = vunpack.c.l.b16 %v47
    %v245 = vunpack.c.l.b16 %v48
    %v246 = vpack.c.b16 %v231, %v230
    %v247 = vpack.c.b16 %v233, %v232
    %v248 = vpack.c.b16 %v235, %v234
    %v249 = vpack.c.b16 %v237, %v236
    %v250 = vpack.c.b16 %v239, %v238
    %v251 = vpack.c.b16 %v241, %v240
    %v252 = vpack.c.b16 %v243, %v242
    %v253 = vpack.c.b16 %v245, %v244
    %262 = vmatprep.subr.bf16.mxu0 0
    %263 = vmatpush1.bf16.msra.mxu0 %v213
    %264 = vmatprep.subr.bf16.mxu0 0
    %265 = vmatpush1.bf16.msra.mxu0 %v212
    %266 = vmatprep.subr.bf16.mxu0 0
    %267 = vmatpush1.bf16.msra.mxu0 %v211
    %268 = vmatprep.subr.bf16.mxu0 0
    %269 = vmatpush1.bf16.msra.mxu0 %v210
    %270 = vmatprep.subr.bf16.mxu0 0
    %271 = vmatpush1.bf16.msra.mxu0 %v209
    %272 = vmatprep.subr.bf16.mxu0 0
    %273 = vmatpush1.bf16.msra.mxu0 %v208
    %274 = vmatprep.subr.bf16.mxu0 0
    %275 = vmatpush1.bf16.msra.mxu0 %v207
    %276 = vmatprep.subr.bf16.mxu0 0
    %277 = vmatpush1.bf16.msra.mxu0 %v206
    %278 = vmatprep.subr.bf16.mxu0 0
    %279 = vmatpush2.bf16.msra.mxu0 0
    %280 = vmatprep.subr.bf16.mxu0 0
    %281 = vmatpush2.bf16.msra.mxu0 0
    %282 = vmatprep.subr.bf16.mxu0 0
    %283 = vmatpush2.bf16.msra.mxu0 0
    %284 = vmatprep.subr.bf16.mxu0 0
    %285 = vmatpush2.bf16.msra.mxu0 0
    %286 = vmatprep.subr.bf16.mxu0 0
    %287 = vmatpush2.bf16.msra.mxu0 0
    %288 = vmatprep.subr.bf16.mxu0 0
    %289 = vmatpush2.bf16.msra.mxu0 0
    %290 = vmatprep.subr.bf16.mxu0 0
    %291 = vmatpush2.bf16.msra.mxu0 0
    %292 = vmatprep.subr.bf16.mxu0 0
    %293 = vmatpush2.bf16.msra.mxu0 0
    %294 = vmatprep.mubr.bf16.mxu0 0
    %295 = vmatmul.mubr.bf16.gmra.mxu0 %v246
    %v296 = vpop.f32.mrf.mxu0
    %v297 = vadd.f32 0.0, %v296
    %v298 = vpop.f32.mrf.mxu0
    %v299 = vpop.f32.mrf.mxu0
    %v300 = vadd.f32 0.0, %v299
    %v301 = vpop.f32.mrf.mxu0
    %302 = vmatprep.mubr.bf16.mxu0 0
    %303 = vmatmul.mubr.bf16.gmra.mxu0 %v247
    %v304 = vpop.f32.mrf.mxu0
    %v305 = vadd.f32 0.0, %v304
    %v306 = vpop.f32.mrf.mxu0
    %v307 = vpop.f32.mrf.mxu0
    %v308 = vadd.f32 0.0, %v307
    %v309 = vpop.f32.mrf.mxu0
    %310 = vmatprep.mubr.bf16.mxu0 0
    %311 = vmatmul.mubr.bf16.gmra.mxu0 %v248
    %v312 = vpop.f32.mrf.mxu0
    %v313 = vadd.f32 0.0, %v312
    %v314 = vpop.f32.mrf.mxu0
    %v315 = vpop.f32.mrf.mxu0
    %v316 = vadd.f32 0.0, %v315
    %v317 = vpop.f32.mrf.mxu0
    %318 = vmatprep.mubr.bf16.mxu0 0
    %319 = vmatmul.mubr.bf16.gmra.mxu0 %v249
    %v320 = vpop.f32.mrf.mxu0
    %v321 = vadd.f32 0.0, %v320
    %v322 = vpop.f32.mrf.mxu0
    %v323 = vpop.f32.mrf.mxu0
    %v324 = vadd.f32 0.0, %v323
    %v325 = vpop.f32.mrf.mxu0
    %326 = vmatprep.mubr.bf16.mxu0 0
    %327 = vmatmul.mubr.bf16.gmra.mxu0 %v250
    %v328 = vpop.f32.mrf.mxu0
    %v329 = vadd.f32 0.0, %v328
    %v330 = vpop.f32.mrf.mxu0
    %v331 = vpop.f32.mrf.mxu0
    %v332 = vadd.f32 0.0, %v331
    %v333 = vpop.f32.mrf.mxu0
    %334 = vmatprep.mubr.bf16.mxu0 0
    %335 = vmatmul.mubr.bf16.gmra.mxu0 %v251
    %v336 = vpop.f32.mrf.mxu0
    %v337 = vadd.f32 0.0, %v336
    %v338 = vpop.f32.mrf.mxu0
    %v339 = vpop.f32.mrf.mxu0
    %v340 = vadd.f32 0.0, %v339
    %v341 = vpop.f32.mrf.mxu0
    %342 = vmatprep.mubr.bf16.mxu0 0
    %343 = vmatmul.mubr.bf16.gmra.mxu0 %v252
    %v344 = vpop.f32.mrf.mxu0
    %v345 = vadd.f32 0.0, %v344
    %v346 = vpop.f32.mrf.mxu0
    %v347 = vpop.f32.mrf.mxu0
    %v348 = vadd.f32 0.0, %v347
    %v349 = vpop.f32.mrf.mxu0
    %350 = vmatprep.mubr.bf16.mxu0 0
    %351 = vmatmul.mubr.bf16.gmra.mxu0 %v253
    %v352 = vpop.f32.mrf.mxu0
    %v353 = vadd.f32 0.0, %v352
    %v354 = vpop.f32.mrf.mxu0
    %v355 = vpop.f32.mrf.mxu0
    %v356 = vadd.f32 0.0, %v355
    %v357 = vpop.f32.mrf.mxu0
    %358 = vdwg.mxu0
    %v361 = vunpack.c.l.b16 %v49
    %v362 = vunpack.c.l.b16 %v50
    %v363 = vpack.c.b16 %v362, %v361
    %365 = vmatprep.subr.bf16.mxu0 0
    %366 = vmatpush1.bf16.msra.mxu0 0
    %367 = vmatprep.subr.bf16.mxu0 0
    %368 = vmatpush1.bf16.msra.mxu0 0
    %369 = vmatprep.subr.bf16.mxu0 0
    %370 = vmatpush1.bf16.msra.mxu0 0
    %371 = vmatprep.subr.bf16.mxu0 0
    %372 = vmatpush1.bf16.msra.mxu0 0
    %373 = vmatprep.subr.bf16.mxu0 0
    %374 = vmatpush1.bf16.msra.mxu0 0
    %375 = vmatprep.subr.bf16.mxu0 0
    %376 = vmatpush1.bf16.msra.mxu0 0
    %377 = vmatprep.subr.bf16.mxu0 0
    %378 = vmatpush1.bf16.msra.mxu0 0
    %379 = vmatprep.subr.bf16.mxu0 0
    %380 = vmatpush1.bf16.msra.mxu0 %v363
    %381 = vmatprep.subr.bf16.mxu0 0
    %382 = vmatpush2.bf16.msra.mxu0 0
    %383 = vmatprep.subr.bf16.mxu0 0
    %384 = vmatpush2.bf16.msra.mxu0 0
    %385 = vmatprep.subr.bf16.mxu0 0
    %386 = vmatpush2.bf16.msra.mxu0 0
    %387 = vmatprep.subr.bf16.mxu0 0
    %388 = vmatpush2.bf16.msra.mxu0 0
    %389 = vmatprep.subr.bf16.mxu0 0
    %390 = vmatpush2.bf16.msra.mxu0 0
    %391 = vmatprep.subr.bf16.mxu0 0
    %392 = vmatpush2.bf16.msra.mxu0 0
    %393 = vmatprep.subr.bf16.mxu0 0
    %394 = vmatpush2.bf16.msra.mxu0 0
    %395 = vmatprep.subr.bf16.mxu0 0
    %396 = vmatpush2.bf16.msra.mxu0 0
    %397 = vmatprep.mubr.bf16.mxu0 0
    %398 = vmatmul.mubr.bf16.gmra.mxu0 %v86
    %v399 = vpop.f32.mrf.mxu0
    %v400 = vadd.f32 %v297, %v399
    %v401 = vpop.f32.mrf.mxu0
    %v402 = vpop.f32.mrf.mxu0
    %v403 = vadd.f32 %v300, %v402
    %v404 = vpop.f32.mrf.mxu0
    %405 = vmatprep.mubr.bf16.mxu0 0
    %406 = vmatmul.mubr.bf16.gmra.mxu0 %v89
    %v407 = vpop.f32.mrf.mxu0
    %v408 = vadd.f32 %v305, %v407
    %v409 = vpop.f32.mrf.mxu0
    %v410 = vpop.f32.mrf.mxu0
    %v411 = vadd.f32 %v308, %v410
    %v412 = vpop.f32.mrf.mxu0
    %413 = vmatprep.mubr.bf16.mxu0 0
    %414 = vmatmul.mubr.bf16.gmra.mxu0 %v92
    %v415 = vpop.f32.mrf.mxu0
    %v416 = vadd.f32 %v313, %v415
    %v417 = vpop.f32.mrf.mxu0
    %v418 = vpop.f32.mrf.mxu0
    %v419 = vadd.f32 %v316, %v418
    %v420 = vpop.f32.mrf.mxu0
    %421 = vmatprep.mubr.bf16.mxu0 0
    %422 = vmatmul.mubr.bf16.gmra.mxu0 %v95
    %v423 = vpop.f32.mrf.mxu0
    %v424 = vadd.f32 %v321, %v423
    %v425 = vpop.f32.mrf.mxu0
    %v426 = vpop.f32.mrf.mxu0
    %v427 = vadd.f32 %v324, %v426
    %v428 = vpop.f32.mrf.mxu0
    %429 = vmatprep.mubr.bf16.mxu0 0
    %430 = vmatmul.mubr.bf16.gmra.mxu0 %v98
    %v431 = vpop.f32.mrf.mxu0
    %v432 = vadd.f32 %v329, %v431
    %v433 = vpop.f32.mrf.mxu0
    %v434 = vpop.f32.mrf.mxu0
    %v435 = vadd.f32 %v332, %v434
    %v436 = vpop.f32.mrf.mxu0
    %437 = vmatprep.mubr.bf16.mxu0 0
    %438 = vmatmul.mubr.bf16.gmra.mxu0 %v101
    %v439 = vpop.f32.mrf.mxu0
    %v440 = vadd.f32 %v337, %v439
    %v441 = vpop.f32.mrf.mxu0
    %v442 = vpop.f32.mrf.mxu0
    %v443 = vadd.f32 %v340, %v442
    %v444 = vpop.f32.mrf.mxu0
    %445 = vmatprep.mubr.bf16.mxu0 0
    %446 = vmatmul.mubr.bf16.gmra.mxu0 %v104
    %v447 = vpop.f32.mrf.mxu0
    %v448 = vadd.f32 %v345, %v447
    %v449 = vpop.f32.mrf.mxu0
    %v450 = vpop.f32.mrf.mxu0
    %v451 = vadd.f32 %v348, %v450
    %v452 = vpop.f32.mrf.mxu0
    %453 = vmatprep.mubr.bf16.mxu0 0
    %454 = vmatmul.mubr.bf16.gmra.mxu0 %v107
    %v455 = vpop.f32.mrf.mxu0
    %v456 = vadd.f32 %v353, %v455
    %v457 = vpop.f32.mrf.mxu0
    %v458 = vpop.f32.mrf.mxu0
    %v459 = vadd.f32 %v356, %v458
    %v460 = vpop.f32.mrf.mxu0
    %461 = vdwg.mxu0
    %v463 = vlaneseq
    %v464 = vshrl.u32 %v463, 7
    %v465 = vsub.s32 0, %v464
    %v466 = vrot.slane %v69, %v465
    %v468 = vadd.f32 %v400, %v466
    %v469 = vadd.f32 %v403, %v466
    %v470 = vadd.f32 %v408, %v466
    %v471 = vadd.f32 %v411, %v466
    %v472 = vadd.f32 %v416, %v466
    %v473 = vadd.f32 %v419, %v466
    %v474 = vadd.f32 %v424, %v466
    %v475 = vadd.f32 %v427, %v466
    %v476 = vadd.f32 %v432, %v466
    %v477 = vadd.f32 %v435, %v466
    %v478 = vadd.f32 %v440, %v466
    %v479 = vadd.f32 %v443, %v466
    %v480 = vadd.f32 %v448, %v466
    %v481 = vadd.f32 %v451, %v466
    %v482 = vadd.f32 %v456, %v466
    %v483 = vadd.f32 %v459, %v466
    %v484 = vmax.f32 %v468, 0.0
    %v485 = vmax.f32 %v469, 0.0
    %v486 = vmax.f32 %v470, 0.0
    %v487 = vmax.f32 %v471, 0.0
    %v488 = vmax.f32 %v472, 0.0
    %v489 = vmax.f32 %v473, 0.0
    %v490 = vmax.f32 %v474, 0.0
    %v491 = vmax.f32 %v475, 0.0
    %v492 = vmax.f32 %v476, 0.0
    %v493 = vmax.f32 %v477, 0.0
    %v494 = vmax.f32 %v478, 0.0
    %v495 = vmax.f32 %v479, 0.0
    %v496 = vmax.f32 %v480, 0.0
    %v497 = vmax.f32 %v481, 0.0
    %v498 = vmax.f32 %v482, 0.0
    %v499 = vmax.f32 %v483, 0.0
    loop: start=0, step=1, limit=3
    $region34: #{graph_conv_block.1} parent=1 // loop_pre_header
      _
    $region35: #{graph_conv_block.1} parent=1 // loop_header
      %s501 = sphi 0, %s505
      %p502 = scmp.ge.s32.totalorder %s501, 3
      %v506 = vphi %v484, %v1496
      %v507 = vphi %v485, %v1497
      %v508 = vphi %v486, %v1498
      %v509 = vphi %v487, %v1499
      %v510 = vphi %v488, %v1500
      %v511 = vphi %v489, %v1501
      %v512 = vphi %v490, %v1502
      %v513 = vphi %v491, %v1503
      %v514 = vphi %v492, %v1504
      %v515 = vphi %v493, %v1505
      %v516 = vphi %v494, %v1506
      %v517 = vphi %v495, %v1507
      %v518 = vphi %v496, %v1508
      %v519 = vphi %v497, %v1509
      %v520 = vphi %v498, %v1510
      %v521 = vphi %v499, %v1511
    $region36: #{graph_conv_block.1} parent=1 // loop_header_branch
      %504 = sbr.rel (%p502) target = $region40
    $region37: #{graph_conv_block.1} parent=1 // loop_body
      %s522 = smul.u32 %s501, 2
      %s523 = smul.u32 %s522, 32
      %s524 = smul.addr %s523, 4
      %s525 = scalar_lea.vmem %s4, %s524
      %v526 = vld [vmem:[%s525] sm:$0xf]
      %v527 = vld [vmem:[%s525 + $0x4] sm:$0xf]
      %v528 = vld [vmem:[%s525 + $0x8] sm:$0xf]
      %v529 = vld [vmem:[%s525 + $0xc] sm:$0xf]
      %v530 = vld [vmem:[%s525 + $0x10] sm:$0xf]
      %v531 = vld [vmem:[%s525 + $0x14] sm:$0xf]
      %v532 = vld [vmem:[%s525 + $0x18] sm:$0xf]
      %v533 = vld [vmem:[%s525 + $0x1c] sm:$0xf]
      %v534 = vld [vmem:[%s525 + $0x20] sm:$0xf]
      %v535 = vld [vmem:[%s525 + $0x24] sm:$0xf]
      %v536 = vld [vmem:[%s525 + $0x28] sm:$0xf]
      %v537 = vld [vmem:[%s525 + $0x2c] sm:$0xf]
      %v538 = vld [vmem:[%s525 + $0x30] sm:$0xf]
      %v539 = vld [vmem:[%s525 + $0x34] sm:$0xf]
      %v540 = vld [vmem:[%s525 + $0x38] sm:$0xf]
      %v541 = vld [vmem:[%s525 + $0x3c] sm:$0xf]
      %v542 = vld [vmem:[%s525 + $0x40] sm:$0xf]
      %v543 = vld [vmem:[%s525 + $0x44] sm:$0xf]
      %v544 = vld [vmem:[%s525 + $0x48] sm:$0xf]
      %v545 = vld [vmem:[%s525 + $0x4c] sm:$0xf]
      %v546 = vld [vmem:[%s525 + $0x50] sm:$0xf]
      %v547 = vld [vmem:[%s525 + $0x54] sm:$0xf]
      %v548 = vld [vmem:[%s525 + $0x58] sm:$0xf]
      %v549 = vld [vmem:[%s525 + $0x5c] sm:$0xf]
      %v550 = vld [vmem:[%s525 + $0x60] sm:$0xf]
      %v551 = vld [vmem:[%s525 + $0x64] sm:$0xf]
      %v552 = vld [vmem:[%s525 + $0x68] sm:$0xf]
      %v553 = vld [vmem:[%s525 + $0x6c] sm:$0xf]
      %v554 = vld [vmem:[%s525 + $0x70] sm:$0xf]
      %v555 = vld [vmem:[%s525 + $0x74] sm:$0xf]
      %v556 = vld [vmem:[%s525 + $0x78] sm:$0xf]
      %v557 = vld [vmem:[%s525 + $0x7c] sm:$0xf]
      %s558 = scalar_lea.vmem %s5, %s522
      %v559 = vld [vmem:[%s558] sm:$0x1]
      %v560 = vpack.c.bf16 %v507, %v506
      %v561 = vpack.c.bf16 %v509, %v508
      %v562 = vpack.c.bf16 %v511, %v510
      %v563 = vpack.c.bf16 %v513, %v512
      %v564 = vpack.c.bf16 %v515, %v514
      %v565 = vpack.c.bf16 %v517, %v516
      %v566 = vpack.c.bf16 %v519, %v518
      %v567 = vpack.c.bf16 %v521, %v520
      %v584 = vunpack.c.l.b16 %v542
      %v585 = vunpack.c.l.b16 %v543
      %v586 = vunpack.c.l.b16 %v544
      %v587 = vunpack.c.l.b16 %v545
      %v588 = vunpack.c.l.b16 %v546
      %v589 = vunpack.c.l.b16 %v547
      %v590 = vunpack.c.l.b16 %v548
      %v591 = vunpack.c.l.b16 %v549
      %v592 = vunpack.c.l.b16 %v550
      %v593 = vunpack.c.l.b16 %v551
      %v594 = vunpack.c.l.b16 %v552
      %v595 = vunpack.c.l.b16 %v553
      %v596 = vunpack.c.l.b16 %v554
      %v597 = vunpack.c.l.b16 %v555
      %v598 = vunpack.c.l.b16 %v556
      %v599 = vunpack.c.l.b16 %v557
      %v600 = vpack.c.b16 %v585, %v584
      %v601 = vpack.c.b16 %v587, %v586
      %v602 = vpack.c.b16 %v589, %v588
      %v603 = vpack.c.b16 %v591, %v590
      %v604 = vpack.c.b16 %v593, %v592
      %v605 = vpack.c.b16 %v595, %v594
      %v606 = vpack.c.b16 %v597, %v596
      %v607 = vpack.c.b16 %v599, %v598
      %616 = vmatprep.subr.bf16.mxu0 0
      %617 = vmatpush1.bf16.msra.mxu0 %v607
      %618 = vmatprep.subr.bf16.mxu0 0
      %619 = vmatpush1.bf16.msra.mxu0 %v606
      %620 = vmatprep.subr.bf16.mxu0 0
      %621 = vmatpush1.bf16.msra.mxu0 %v605
      %622 = vmatprep.subr.bf16.mxu0 0
      %623 = vmatpush1.bf16.msra.mxu0 %v604
      %624 = vmatprep.subr.bf16.mxu0 0
      %625 = vmatpush1.bf16.msra.mxu0 %v603
      %626 = vmatprep.subr.bf16.mxu0 0
      %627 = vmatpush1.bf16.msra.mxu0 %v602
      %628 = vmatprep.subr.bf16.mxu0 0
      %629 = vmatpush1.bf16.msra.mxu0 %v601
      %630 = vmatprep.subr.bf16.mxu0 0
      %631 = vmatpush1.bf16.msra.mxu0 %v600
      %632 = vmatprep.subr.bf16.mxu0 0
      %633 = vmatpush2.bf16.msra.mxu0 0
      %634 = vmatprep.subr.bf16.mxu0 0
      %635 = vmatpush2.bf16.msra.mxu0 0
      %636 = vmatprep.subr.bf16.mxu0 0
      %637 = vmatpush2.bf16.msra.mxu0 0
      %638 = vmatprep.subr.bf16.mxu0 0
      %639 = vmatpush2.bf16.msra.mxu0 0
      %640 = vmatprep.subr.bf16.mxu0 0
      %641 = vmatpush2.bf16.msra.mxu0 0
      %642 = vmatprep.subr.bf16.mxu0 0
      %643 = vmatpush2.bf16.msra.mxu0 0
      %644 = vmatprep.subr.bf16.mxu0 0
      %645 = vmatpush2.bf16.msra.mxu0 0
      %646 = vmatprep.subr.bf16.mxu0 0
      %647 = vmatpush2.bf16.msra.mxu0 0
      %648 = vmatprep.mubr.bf16.mxu0 0
      %649 = vmatmul.mubr.bf16.gmra.mxu0 %v560
      %v650 = vpop.f32.mrf.mxu0
      %v651 = vadd.f32 0.0, %v650
      %v652 = vpop.f32.mrf.mxu0
      %v653 = vpop.f32.mrf.mxu0
      %v654 = vadd.f32 0.0, %v653
      %v655 = vpop.f32.mrf.mxu0
      %656 = vmatprep.mubr.bf16.mxu0 0
      %657 = vmatmul.mubr.bf16.gmra.mxu0 %v561
      %v658 = vpop.f32.mrf.mxu0
      %v659 = vadd.f32 0.0, %v658
      %v660 = vpop.f32.mrf.mxu0
      %v661 = vpop.f32.mrf.mxu0
      %v662 = vadd.f32 0.0, %v661
      %v663 = vpop.f32.mrf.mxu0
      %664 = vmatprep.mubr.bf16.mxu0 0
      %665 = vmatmul.mubr.bf16.gmra.mxu0 %v562
      %v666 = vpop.f32.mrf.mxu0
      %v667 = vadd.f32 0.0, %v666
      %v668 = vpop.f32.mrf.mxu0
      %v669 = vpop.f32.mrf.mxu0
      %v670 = vadd.f32 0.0, %v669
      %v671 = vpop.f32.mrf.mxu0
      %672 = vmatprep.mubr.bf16.mxu0 0
      %673 = vmatmul.mubr.bf16.gmra.mxu0 %v563
      %v674 = vpop.f32.mrf.mxu0
      %v675 = vadd.f32 0.0, %v674
      %v676 = vpop.f32.mrf.mxu0
      %v677 = vpop.f32.mrf.mxu0
      %v678 = vadd.f32 0.0, %v677
      %v679 = vpop.f32.mrf.mxu0
      %680 = vmatprep.mubr.bf16.mxu0 0
      %681 = vmatmul.mubr.bf16.gmra.mxu0 %v564
      %v682 = vpop.f32.mrf.mxu0
      %v683 = vadd.f32 0.0, %v682
      %v684 = vpop.f32.mrf.mxu0
      %v685 = vpop.f32.mrf.mxu0
      %v686 = vadd.f32 0.0, %v685
      %v687 = vpop.f32.mrf.mxu0
      %688 = vmatprep.mubr.bf16.mxu0 0
      %689 = vmatmul.mubr.bf16.gmra.mxu0 %v565
      %v690 = vpop.f32.mrf.mxu0
      %v691 = vadd.f32 0.0, %v690
      %v692 = vpop.f32.mrf.mxu0
      %v693 = vpop.f32.mrf.mxu0
      %v694 = vadd.f32 0.0, %v693
      %v695 = vpop.f32.mrf.mxu0
      %696 = vmatprep.mubr.bf16.mxu0 0
      %697 = vmatmul.mubr.bf16.gmra.mxu0 %v566
      %v698 = vpop.f32.mrf.mxu0
      %v699 = vadd.f32 0.0, %v698
      %v700 = vpop.f32.mrf.mxu0
      %v701 = vpop.f32.mrf.mxu0
      %v702 = vadd.f32 0.0, %v701
      %v703 = vpop.f32.mrf.mxu0
      %704 = vmatprep.mubr.bf16.mxu0 0
      %705 = vmatmul.mubr.bf16.gmra.mxu0 %v567
      %v706 = vpop.f32.mrf.mxu0
      %v707 = vadd.f32 0.0, %v706
      %v708 = vpop.f32.mrf.mxu0
      %v709 = vpop.f32.mrf.mxu0
      %v710 = vadd.f32 0.0, %v709
      %v711 = vpop.f32.mrf.mxu0
      %712 = vdwg.mxu0
      %v713 = vpack.c.bf16 %v654, %v651
      %v714 = vpack.c.bf16 %v662, %v659
      %v715 = vpack.c.bf16 %v670, %v667
      %v716 = vpack.c.bf16 %v678, %v675
      %v717 = vpack.c.bf16 %v686, %v683
      %v718 = vpack.c.bf16 %v694, %v691
      %v719 = vpack.c.bf16 %v702, %v699
      %v720 = vpack.c.bf16 %v710, %v707
      %721 = vmatprep.subr.bf16.mxu0 0
      %722 = vmatpush1.bf16.msra.mxu0 %v720
      %723 = vmatprep.subr.bf16.mxu0 0
      %724 = vmatpush1.bf16.msra.mxu0 %v719
      %725 = vmatprep.subr.bf16.mxu0 0
      %726 = vmatpush1.bf16.msra.mxu0 %v718
      %727 = vmatprep.subr.bf16.mxu0 0
      %728 = vmatpush1.bf16.msra.mxu0 %v717
      %729 = vmatprep.subr.bf16.mxu0 0
      %730 = vmatpush1.bf16.msra.mxu0 %v716
      %731 = vmatprep.subr.bf16.mxu0 0
      %732 = vmatpush1.bf16.msra.mxu0 %v715
      %733 = vmatprep.subr.bf16.mxu0 0
      %734 = vmatpush1.bf16.msra.mxu0 %v714
      %735 = vmatprep.subr.bf16.mxu0 0
      %736 = vmatpush1.bf16.msra.mxu0 %v713
      %737 = vmatprep.subr.bf16.mxu0 0
      %738 = vmatpush2.bf16.msra.mxu0 0
      %739 = vmatprep.subr.bf16.mxu0 0
      %740 = vmatpush2.bf16.msra.mxu0 0
      %741 = vmatprep.subr.bf16.mxu0 0
      %742 = vmatpush2.bf16.msra.mxu0 0
      %743 = vmatprep.subr.bf16.mxu0 0
      %744 = vmatpush2.bf16.msra.mxu0 0
      %745 = vmatprep.subr.bf16.mxu0 0
      %746 = vmatpush2.bf16.msra.mxu0 0
      %747 = vmatprep.subr.bf16.mxu0 0
      %748 = vmatpush2.bf16.msra.mxu0 0
      %749 = vmatprep.subr.bf16.mxu0 0
      %750 = vmatpush2.bf16.msra.mxu0 0
      %751 = vmatprep.subr.bf16.mxu0 0
      %752 = vmatpush2.bf16.msra.mxu0 0
      %753 = vmatprep.mubr.bf16.mxu0 0
      %754 = vmatmul.mubr.bf16.gmra.mxu0 %v246
      %v755 = vpop.f32.mrf.mxu0
      %v756 = vadd.f32 0.0, %v755
      %v757 = vpop.f32.mrf.mxu0
      %v758 = vpop.f32.mrf.mxu0
      %v759 = vadd.f32 0.0, %v758
      %v760 = vpop.f32.mrf.mxu0
      %761 = vmatprep.mubr.bf16.mxu0 0
      %762 = vmatmul.mubr.bf16.gmra.mxu0 %v247
      %v763 = vpop.f32.mrf.mxu0
      %v764 = vadd.f32 0.0, %v763
      %v765 = vpop.f32.mrf.mxu0
      %v766 = vpop.f32.mrf.mxu0
      %v767 = vadd.f32 0.0, %v766
      %v768 = vpop.f32.mrf.mxu0
      %769 = vmatprep.mubr.bf16.mxu0 0
      %770 = vmatmul.mubr.bf16.gmra.mxu0 %v248
      %v771 = vpop.f32.mrf.mxu0
      %v772 = vadd.f32 0.0, %v771
      %v773 = vpop.f32.mrf.mxu0
      %v774 = vpop.f32.mrf.mxu0
      %v775 = vadd.f32 0.0, %v774
      %v776 = vpop.f32.mrf.mxu0
      %777 = vmatprep.mubr.bf16.mxu0 0
      %778 = vmatmul.mubr.bf16.gmra.mxu0 %v249
      %v779 = vpop.f32.mrf.mxu0
      %v780 = vadd.f32 0.0, %v779
      %v781 = vpop.f32.mrf.mxu0
      %v782 = vpop.f32.mrf.mxu0
      %v783 = vadd.f32 0.0, %v782
      %v784 = vpop.f32.mrf.mxu0
      %785 = vmatprep.mubr.bf16.mxu0 0
      %786 = vmatmul.mubr.bf16.gmra.mxu0 %v250
      %v787 = vpop.f32.mrf.mxu0
      %v788 = vadd.f32 0.0, %v787
      %v789 = vpop.f32.mrf.mxu0
      %v790 = vpop.f32.mrf.mxu0
      %v791 = vadd.f32 0.0, %v790
      %v792 = vpop.f32.mrf.mxu0
      %793 = vmatprep.mubr.bf16.mxu0 0
      %794 = vmatmul.mubr.bf16.gmra.mxu0 %v251
      %v795 = vpop.f32.mrf.mxu0
      %v796 = vadd.f32 0.0, %v795
      %v797 = vpop.f32.mrf.mxu0
      %v798 = vpop.f32.mrf.mxu0
      %v799 = vadd.f32 0.0, %v798
      %v800 = vpop.f32.mrf.mxu0
      %801 = vmatprep.mubr.bf16.mxu0 0
      %802 = vmatmul.mubr.bf16.gmra.mxu0 %v252
      %v803 = vpop.f32.mrf.mxu0
      %v804 = vadd.f32 0.0, %v803
      %v805 = vpop.f32.mrf.mxu0
      %v806 = vpop.f32.mrf.mxu0
      %v807 = vadd.f32 0.0, %v806
      %v808 = vpop.f32.mrf.mxu0
      %809 = vmatprep.mubr.bf16.mxu0 0
      %810 = vmatmul.mubr.bf16.gmra.mxu0 %v253
      %v811 = vpop.f32.mrf.mxu0
      %v812 = vadd.f32 0.0, %v811
      %v813 = vpop.f32.mrf.mxu0
      %v814 = vpop.f32.mrf.mxu0
      %v815 = vadd.f32 0.0, %v814
      %v816 = vpop.f32.mrf.mxu0
      %817 = vdwg.mxu0
      %v834 = vunpack.c.l.b16 %v526
      %v835 = vunpack.c.l.b16 %v527
      %v836 = vunpack.c.l.b16 %v528
      %v837 = vunpack.c.l.b16 %v529
      %v838 = vunpack.c.l.b16 %v530
      %v839 = vunpack.c.l.b16 %v531
      %v840 = vunpack.c.l.b16 %v532
      %v841 = vunpack.c.l.b16 %v533
      %v842 = vunpack.c.l.b16 %v534
      %v843 = vunpack.c.l.b16 %v535
      %v844 = vunpack.c.l.b16 %v536
      %v845 = vunpack.c.l.b16 %v537
      %v846 = vunpack.c.l.b16 %v538
      %v847 = vunpack.c.l.b16 %v539
      %v848 = vunpack.c.l.b16 %v540
      %v849 = vunpack.c.l.b16 %v541
      %v850 = vpack.c.b16 %v835, %v834
      %v851 = vpack.c.b16 %v837, %v836
      %v852 = vpack.c.b16 %v839, %v838
      %v853 = vpack.c.b16 %v841, %v840
      %v854 = vpack.c.b16 %v843, %v842
      %v855 = vpack.c.b16 %v845, %v844
      %v856 = vpack.c.b16 %v847, %v846
      %v857 = vpack.c.b16 %v849, %v848
      %866 = vmatprep.subr.bf16.mxu0 0
      %867 = vmatpush1.bf16.msra.mxu0 %v857
      %868 = vmatprep.subr.bf16.mxu0 0
      %869 = vmatpush1.bf16.msra.mxu0 %v856
      %870 = vmatprep.subr.bf16.mxu0 0
      %871 = vmatpush1.bf16.msra.mxu0 %v855
      %872 = vmatprep.subr.bf16.mxu0 0
      %873 = vmatpush1.bf16.msra.mxu0 %v854
      %874 = vmatprep.subr.bf16.mxu0 0
      %875 = vmatpush1.bf16.msra.mxu0 %v853
      %876 = vmatprep.subr.bf16.mxu0 0
      %877 = vmatpush1.bf16.msra.mxu0 %v852
      %878 = vmatprep.subr.bf16.mxu0 0
      %879 = vmatpush1.bf16.msra.mxu0 %v851
      %880 = vmatprep.subr.bf16.mxu0 0
      %881 = vmatpush1.bf16.msra.mxu0 %v850
      %882 = vmatprep.subr.bf16.mxu0 0
      %883 = vmatpush2.bf16.msra.mxu0 0
      %884 = vmatprep.subr.bf16.mxu0 0
      %885 = vmatpush2.bf16.msra.mxu0 0
      %886 = vmatprep.subr.bf16.mxu0 0
      %887 = vmatpush2.bf16.msra.mxu0 0
      %888 = vmatprep.subr.bf16.mxu0 0
      %889 = vmatpush2.bf16.msra.mxu0 0
      %890 = vmatprep.subr.bf16.mxu0 0
      %891 = vmatpush2.bf16.msra.mxu0 0
      %892 = vmatprep.subr.bf16.mxu0 0
      %893 = vmatpush2.bf16.msra.mxu0 0
      %894 = vmatprep.subr.bf16.mxu0 0
      %895 = vmatpush2.bf16.msra.mxu0 0
      %896 = vmatprep.subr.bf16.mxu0 0
      %897 = vmatpush2.bf16.msra.mxu0 0
      %898 = vmatprep.mubr.bf16.mxu0 0
      %899 = vmatmul.mubr.bf16.gmra.mxu0 %v560
      %v900 = vpop.f32.mrf.mxu0
      %v901 = vadd.f32 %v756, %v900
      %v902 = vpop.f32.mrf.mxu0
      %v903 = vpop.f32.mrf.mxu0
      %v904 = vadd.f32 %v759, %v903
      %v905 = vpop.f32.mrf.mxu0
      %906 = vmatprep.mubr.bf16.mxu0 0
      %907 = vmatmul.mubr.bf16.gmra.mxu0 %v561
      %v908 = vpop.f32.mrf.mxu0
      %v909 = vadd.f32 %v764, %v908
      %v910 = vpop.f32.mrf.mxu0
      %v911 = vpop.f32.mrf.mxu0
      %v912 = vadd.f32 %v767, %v911
      %v913 = vpop.f32.mrf.mxu0
      %914 = vmatprep.mubr.bf16.mxu0 0
      %915 = vmatmul.mubr.bf16.gmra.mxu0 %v562
      %v916 = vpop.f32.mrf.mxu0
      %v917 = vadd.f32 %v772, %v916
      %v918 = vpop.f32.mrf.mxu0
      %v919 = vpop.f32.mrf.mxu0
      %v920 = vadd.f32 %v775, %v919
      %v921 = vpop.f32.mrf.mxu0
      %922 = vmatprep.mubr.bf16.mxu0 0
      %923 = vmatmul.mubr.bf16.gmra.mxu0 %v563
      %v924 = vpop.f32.mrf.mxu0
      %v925 = vadd.f32 %v780, %v924
      %v926 = vpop.f32.mrf.mxu0
      %v927 = vpop.f32.mrf.mxu0
      %v928 = vadd.f32 %v783, %v927
      %v929 = vpop.f32.mrf.mxu0
      %930 = vmatprep.mubr.bf16.mxu0 0
      %931 = vmatmul.mubr.bf16.gmra.mxu0 %v564
      %v932 = vpop.f32.mrf.mxu0
      %v933 = vadd.f32 %v788, %v932
      %v934 = vpop.f32.mrf.mxu0
      %v935 = vpop.f32.mrf.mxu0
      %v936 = vadd.f32 %v791, %v935
      %v937 = vpop.f32.mrf.mxu0
      %938 = vmatprep.mubr.bf16.mxu0 0
      %939 = vmatmul.mubr.bf16.gmra.mxu0 %v565
      %v940 = vpop.f32.mrf.mxu0
      %v941 = vadd.f32 %v796, %v940
      %v942 = vpop.f32.mrf.mxu0
      %v943 = vpop.f32.mrf.mxu0
      %v944 = vadd.f32 %v799, %v943
      %v945 = vpop.f32.mrf.mxu0
      %946 = vmatprep.mubr.bf16.mxu0 0
      %947 = vmatmul.mubr.bf16.gmra.mxu0 %v566
      %v948 = vpop.f32.mrf.mxu0
      %v949 = vadd.f32 %v804, %v948
      %v950 = vpop.f32.mrf.mxu0
      %v951 = vpop.f32.mrf.mxu0
      %v952 = vadd.f32 %v807, %v951
      %v953 = vpop.f32.mrf.mxu0
      %954 = vmatprep.mubr.bf16.mxu0 0
      %955 = vmatmul.mubr.bf16.gmra.mxu0 %v567
      %v956 = vpop.f32.mrf.mxu0
      %v957 = vadd.f32 %v812, %v956
      %v958 = vpop.f32.mrf.mxu0
      %v959 = vpop.f32.mrf.mxu0
      %v960 = vadd.f32 %v815, %v959
      %v961 = vpop.f32.mrf.mxu0
      %962 = vdwg.mxu0
      %v964 = vlaneseq
      %v965 = vshrl.u32 %v964, 7
      %v966 = vsub.s32 0, %v965
      %v967 = vrot.slane %v559, %v966
      %v969 = vadd.f32 %v901, %v967
      %v970 = vadd.f32 %v904, %v967
      %v971 = vadd.f32 %v909, %v967
      %v972 = vadd.f32 %v912, %v967
      %v973 = vadd.f32 %v917, %v967
      %v974 = vadd.f32 %v920, %v967
      %v975 = vadd.f32 %v925, %v967
      %v976 = vadd.f32 %v928, %v967
      %v977 = vadd.f32 %v933, %v967
      %v978 = vadd.f32 %v936, %v967
      %v979 = vadd.f32 %v941, %v967
      %v980 = vadd.f32 %v944, %v967
      %v981 = vadd.f32 %v949, %v967
      %v982 = vadd.f32 %v952, %v967
      %v983 = vadd.f32 %v957, %v967
      %v984 = vadd.f32 %v960, %v967
      %v985 = vmax.f32 %v969, 0.0
      %v986 = vmax.f32 %v970, 0.0
      %v987 = vmax.f32 %v971, 0.0
      %v988 = vmax.f32 %v972, 0.0
      %v989 = vmax.f32 %v973, 0.0
      %v990 = vmax.f32 %v974, 0.0
      %v991 = vmax.f32 %v975, 0.0
      %v992 = vmax.f32 %v976, 0.0
      %v993 = vmax.f32 %v977, 0.0
      %v994 = vmax.f32 %v978, 0.0
      %v995 = vmax.f32 %v979, 0.0
      %v996 = vmax.f32 %v980, 0.0
      %v997 = vmax.f32 %v981, 0.0
      %v998 = vmax.f32 %v982, 0.0
      %v999 = vmax.f32 %v983, 0.0
      %v1000 = vmax.f32 %v984, 0.0
      %s1001 = sadd.s32 %s522, 1
      %s1002 = smul.u32 %s1001, 32
      %s1003 = smul.addr %s1002, 4
      %s1004 = scalar_lea.vmem %s4, %s1003
      %v1005 = vld [vmem:[%s1004] sm:$0xf]
      %v1006 = vld [vmem:[%s1004 + $0x4] sm:$0xf]
      %v1007 = vld [vmem:[%s1004 + $0x8] sm:$0xf]
      %v1008 = vld [vmem:[%s1004 + $0xc] sm:$0xf]
      %v1009 = vld [vmem:[%s1004 + $0x10] sm:$0xf]
      %v1010 = vld [vmem:[%s1004 + $0x14] sm:$0xf]
      %v1011 = vld [vmem:[%s1004 + $0x18] sm:$0xf]
      %v1012 = vld [vmem:[%s1004 + $0x1c] sm:$0xf]
      %v1013 = vld [vmem:[%s1004 + $0x20] sm:$0xf]
      %v1014 = vld [vmem:[%s1004 + $0x24] sm:$0xf]
      %v1015 = vld [vmem:[%s1004 + $0x28] sm:$0xf]
      %v1016 = vld [vmem:[%s1004 + $0x2c] sm:$0xf]
      %v1017 = vld [vmem:[%s1004 + $0x30] sm:$0xf]
      %v1018 = vld [vmem:[%s1004 + $0x34] sm:$0xf]
      %v1019 = vld [vmem:[%s1004 + $0x38] sm:$0xf]
      %v1020 = vld [vmem:[%s1004 + $0x3c] sm:$0xf]
      %v1021 = vld [vmem:[%s1004 + $0x40] sm:$0xf]
      %v1022 = vld [vmem:[%s1004 + $0x44] sm:$0xf]
      %v1023 = vld [vmem:[%s1004 + $0x48] sm:$0xf]
      %v1024 = vld [vmem:[%s1004 + $0x4c] sm:$0xf]
      %v1025 = vld [vmem:[%s1004 + $0x50] sm:$0xf]
      %v1026 = vld [vmem:[%s1004 + $0x54] sm:$0xf]
      %v1027 = vld [vmem:[%s1004 + $0x58] sm:$0xf]
      %v1028 = vld [vmem:[%s1004 + $0x5c] sm:$0xf]
      %v1029 = vld [vmem:[%s1004 + $0x60] sm:$0xf]
      %v1030 = vld [vmem:[%s1004 + $0x64] sm:$0xf]
      %v1031 = vld [vmem:[%s1004 + $0x68] sm:$0xf]
      %v1032 = vld [vmem:[%s1004 + $0x6c] sm:$0xf]
      %v1033 = vld [vmem:[%s1004 + $0x70] sm:$0xf]
      %v1034 = vld [vmem:[%s1004 + $0x74] sm:$0xf]
      %v1035 = vld [vmem:[%s1004 + $0x78] sm:$0xf]
      %v1036 = vld [vmem:[%s1004 + $0x7c] sm:$0xf]
      %s1037 = scalar_lea.vmem %s5, %s1001
      %v1038 = vld [vmem:[%s1037] sm:$0x1]
      %v1039 = vpack.c.bf16 %v986, %v985
      %v1040 = vpack.c.bf16 %v988, %v987
      %v1041 = vpack.c.bf16 %v990, %v989
      %v1042 = vpack.c.bf16 %v992, %v991
      %v1043 = vpack.c.bf16 %v994, %v993
      %v1044 = vpack.c.bf16 %v996, %v995
      %v1045 = vpack.c.bf16 %v998, %v997
      %v1046 = vpack.c.bf16 %v1000, %v999
      %v1063 = vunpack.c.l.b16 %v1021
      %v1064 = vunpack.c.l.b16 %v1022
      %v1065 = vunpack.c.l.b16 %v1023
      %v1066 = vunpack.c.l.b16 %v1024
      %v1067 = vunpack.c.l.b16 %v1025
      %v1068 = vunpack.c.l.b16 %v1026
      %v1069 = vunpack.c.l.b16 %v1027
      %v1070 = vunpack.c.l.b16 %v1028
      %v1071 = vunpack.c.l.b16 %v1029
      %v1072 = vunpack.c.l.b16 %v1030
      %v1073 = vunpack.c.l.b16 %v1031
      %v1074 = vunpack.c.l.b16 %v1032
      %v1075 = vunpack.c.l.b16 %v1033
      %v1076 = vunpack.c.l.b16 %v1034
      %v1077 = vunpack.c.l.b16 %v1035
      %v1078 = vunpack.c.l.b16 %v1036
      %v1079 = vpack.c.b16 %v1064, %v1063
      %v1080 = vpack.c.b16 %v1066, %v1065
      %v1081 = vpack.c.b16 %v1068, %v1067
      %v1082 = vpack.c.b16 %v1070, %v1069
      %v1083 = vpack.c.b16 %v1072, %v1071
      %v1084 = vpack.c.b16 %v1074, %v1073
      %v1085 = vpack.c.b16 %v1076, %v1075
      %v1086 = vpack.c.b16 %v1078, %v1077
      %1095 = vmatprep.subr.bf16.mxu0 0
      %1096 = vmatpush1.bf16.msra.mxu0 %v1086
      %1097 = vmatprep.subr.bf16.mxu0 0
      %1098 = vmatpush1.bf16.msra.mxu0 %v1085
      %1099 = vmatprep.subr.bf16.mxu0 0
      %1100 = vmatpush1.bf16.msra.mxu0 %v1084
      %1101 = vmatprep.subr.bf16.mxu0 0
      %1102 = vmatpush1.bf16.msra.mxu0 %v1083
      %1103 = vmatprep.subr.bf16.mxu0 0
      %1104 = vmatpush1.bf16.msra.mxu0 %v1082
      %1105 = vmatprep.subr.bf16.mxu0 0
      %1106 = vmatpush1.bf16.msra.mxu0 %v1081
      %1107 = vmatprep.subr.bf16.mxu0 0
      %1108 = vmatpush1.bf16.msra.mxu0 %v1080
      %1109 = vmatprep.subr.bf16.mxu0 0
      %1110 = vmatpush1.bf16.msra.mxu0 %v1079
      %1111 = vmatprep.subr.bf16.mxu0 0
      %1112 = vmatpush2.bf16.msra.mxu0 0
      %1113 = vmatprep.subr.bf16.mxu0 0
      %1114 = vmatpush2.bf16.msra.mxu0 0
      %1115 = vmatprep.subr.bf16.mxu0 0
      %1116 = vmatpush2.bf16.msra.mxu0 0
      %1117 = vmatprep.subr.bf16.mxu0 0
      %1118 = vmatpush2.bf16.msra.mxu0 0
      %1119 = vmatprep.subr.bf16.mxu0 0
      %1120 = vmatpush2.bf16.msra.mxu0 0
      %1121 = vmatprep.subr.bf16.mxu0 0
      %1122 = vmatpush2.bf16.msra.mxu0 0
      %1123 = vmatprep.subr.bf16.mxu0 0
      %1124 = vmatpush2.bf16.msra.mxu0 0
      %1125 = vmatprep.subr.bf16.mxu0 0
      %1126 = vmatpush2.bf16.msra.mxu0 0
      %1127 = vmatprep.mubr.bf16.mxu0 0
      %1128 = vmatmul.mubr.bf16.gmra.mxu0 %v1039
      %v1129 = vpop.f32.mrf.mxu0
      %v1130 = vadd.f32 0.0, %v1129
      %v1131 = vpop.f32.mrf.mxu0
      %v1132 = vpop.f32.mrf.mxu0
      %v1133 = vadd.f32 0.0, %v1132
      %v1134 = vpop.f32.mrf.mxu0
      %1135 = vmatprep.mubr.bf16.mxu0 0
      %1136 = vmatmul.mubr.bf16.gmra.mxu0 %v1040
      %v1137 = vpop.f32.mrf.mxu0
      %v1138 = vadd.f32 0.0, %v1137
      %v1139 = vpop.f32.mrf.mxu0
      %v1140 = vpop.f32.mrf.mxu0
      %v1141 = vadd.f32 0.0, %v1140
      %v1142 = vpop.f32.mrf.mxu0
      %1143 = vmatprep.mubr.bf16.mxu0 0
      %1144 = vmatmul.mubr.bf16.gmra.mxu0 %v1041
      %v1145 = vpop.f32.mrf.mxu0
      %v1146 = vadd.f32 0.0, %v1145
      %v1147 = vpop.f32.mrf.mxu0
      %v1148 = vpop.f32.mrf.mxu0
      %v1149 = vadd.f32 0.0, %v1148
      %v1150 = vpop.f32.mrf.mxu0
      %1151 = vmatprep.mubr.bf16.mxu0 0
      %1152 = vmatmul.mubr.bf16.gmra.mxu0 %v1042
      %v1153 = vpop.f32.mrf.mxu0
      %v1154 = vadd.f32 0.0, %v1153
      %v1155 = vpop.f32.mrf.mxu0
      %v1156 = vpop.f32.mrf.mxu0
      %v1157 = vadd.f32 0.0, %v1156
      %v1158 = vpop.f32.mrf.mxu0
      %1159 = vmatprep.mubr.bf16.mxu0 0
      %1160 = vmatmul.mubr.bf16.gmra.mxu0 %v1043
      %v1161 = vpop.f32.mrf.mxu0
      %v1162 = vadd.f32 0.0, %v1161
      %v1163 = vpop.f32.mrf.mxu0
      %v1164 = vpop.f32.mrf.mxu0
      %v1165 = vadd.f32 0.0, %v1164
      %v1166 = vpop.f32.mrf.mxu0
      %1167 = vmatprep.mubr.bf16.mxu0 0
      %1168 = vmatmul.mubr.bf16.gmra.mxu0 %v1044
      %v1169 = vpop.f32.mrf.mxu0
      %v1170 = vadd.f32 0.0, %v1169
      %v1171 = vpop.f32.mrf.mxu0
      %v1172 = vpop.f32.mrf.mxu0
      %v1173 = vadd.f32 0.0, %v1172
      %v1174 = vpop.f32.mrf.mxu0
      %1175 = vmatprep.mubr.bf16.mxu0 0
      %1176 = vmatmul.mubr.bf16.gmra.mxu0 %v1045
      %v1177 = vpop.f32.mrf.mxu0
      %v1178 = vadd.f32 0.0, %v1177
      %v1179 = vpop.f32.mrf.mxu0
      %v1180 = vpop.f32.mrf.mxu0
      %v1181 = vadd.f32 0.0, %v1180
      %v1182 = vpop.f32.mrf.mxu0
      %1183 = vmatprep.mubr.bf16.mxu0 0
      %1184 = vmatmul.mubr.bf16.gmra.mxu0 %v1046
      %v1185 = vpop.f32.mrf.mxu0
      %v1186 = vadd.f32 0.0, %v1185
      %v1187 = vpop.f32.mrf.mxu0
      %v1188 = vpop.f32.mrf.mxu0
      %v1189 = vadd.f32 0.0, %v1188
      %v1190 = vpop.f32.mrf.mxu0
      %1191 = vdwg.mxu0
      %v1192 = vpack.c.bf16 %v1133, %v1130
      %v1193 = vpack.c.bf16 %v1141, %v1138
      %v1194 = vpack.c.bf16 %v1149, %v1146
      %v1195 = vpack.c.bf16 %v1157, %v1154
      %v1196 = vpack.c.bf16 %v1165, %v1162
      %v1197 = vpack.c.bf16 %v1173, %v1170
      %v1198 = vpack.c.bf16 %v1181, %v1178
      %v1199 = vpack.c.bf16 %v1189, %v1186
      %1200 = vmatprep.subr.bf16.mxu0 0
      %1201 = vmatpush1.bf16.msra.mxu0 %v1199
      %1202 = vmatprep.subr.bf16.mxu0 0
      %1203 = vmatpush1.bf16.msra.mxu0 %v1198
      %1204 = vmatprep.subr.bf16.mxu0 0
      %1205 = vmatpush1.bf16.msra.mxu0 %v1197
      %1206 = vmatprep.subr.bf16.mxu0 0
      %1207 = vmatpush1.bf16.msra.mxu0 %v1196
      %1208 = vmatprep.subr.bf16.mxu0 0
      %1209 = vmatpush1.bf16.msra.mxu0 %v1195
      %1210 = vmatprep.subr.bf16.mxu0 0
      %1211 = vmatpush1.bf16.msra.mxu0 %v1194
      %1212 = vmatprep.subr.bf16.mxu0 0
      %1213 = vmatpush1.bf16.msra.mxu0 %v1193
      %1214 = vmatprep.subr.bf16.mxu0 0
      %1215 = vmatpush1.bf16.msra.mxu0 %v1192
      %1216 = vmatprep.subr.bf16.mxu0 0
      %1217 = vmatpush2.bf16.msra.mxu0 0
      %1218 = vmatprep.subr.bf16.mxu0 0
      %1219 = vmatpush2.bf16.msra.mxu0 0
      %1220 = vmatprep.subr.bf16.mxu0 0
      %1221 = vmatpush2.bf16.msra.mxu0 0
      %1222 = vmatprep.subr.bf16.mxu0 0
      %1223 = vmatpush2.bf16.msra.mxu0 0
      %1224 = vmatprep.subr.bf16.mxu0 0
      %1225 = vmatpush2.bf16.msra.mxu0 0
      %1226 = vmatprep.subr.bf16.mxu0 0
      %1227 = vmatpush2.bf16.msra.mxu0 0
      %1228 = vmatprep.subr.bf16.mxu0 0
      %1229 = vmatpush2.bf16.msra.mxu0 0
      %1230 = vmatprep.subr.bf16.mxu0 0
      %1231 = vmatpush2.bf16.msra.mxu0 0
      %1232 = vmatprep.mubr.bf16.mxu0 0
      %1233 = vmatmul.mubr.bf16.gmra.mxu0 %v246
      %v1234 = vpop.f32.mrf.mxu0
      %v1235 = vadd.f32 0.0, %v1234
      %v1236 = vpop.f32.mrf.mxu0
      %v1237 = vpop.f32.mrf.mxu0
      %v1238 = vadd.f32 0.0, %v1237
      %v1239 = vpop.f32.mrf.mxu0
      %1240 = vmatprep.mubr.bf16.mxu0 0
      %1241 = vmatmul.mubr.bf16.gmra.mxu0 %v247
      %v1242 = vpop.f32.mrf.mxu0
      %v1243 = vadd.f32 0.0, %v1242
      %v1244 = vpop.f32.mrf.mxu0
      %v1245 = vpop.f32.mrf.mxu0
      %v1246 = vadd.f32 0.0, %v1245
      %v1247 = vpop.f32.mrf.mxu0
      %1248 = vmatprep.mubr.bf16.mxu0 0
      %1249 = vmatmul.mubr.bf16.gmra.mxu0 %v248
      %v1250 = vpop.f32.mrf.mxu0
      %v1251 = vadd.f32 0.0, %v1250
      %v1252 = vpop.f32.mrf.mxu0
      %v1253 = vpop.f32.mrf.mxu0
      %v1254 = vadd.f32 0.0, %v1253
      %v1255 = vpop.f32.mrf.mxu0
      %1256 = vmatprep.mubr.bf16.mxu0 0
      %1257 = vmatmul.mubr.bf16.gmra.mxu0 %v249
      %v1258 = vpop.f32.mrf.mxu0
      %v1259 = vadd.f32 0.0, %v1258
      %v1260 = vpop.f32.mrf.mxu0
      %v1261 = vpop.f32.mrf.mxu0
      %v1262 = vadd.f32 0.0, %v1261
      %v1263 = vpop.f32.mrf.mxu0
      %1264 = vmatprep.mubr.bf16.mxu0 0
      %1265 = vmatmul.mubr.bf16.gmra.mxu0 %v250
      %v1266 = vpop.f32.mrf.mxu0
      %v1267 = vadd.f32 0.0, %v1266
      %v1268 = vpop.f32.mrf.mxu0
      %v1269 = vpop.f32.mrf.mxu0
      %v1270 = vadd.f32 0.0, %v1269
      %v1271 = vpop.f32.mrf.mxu0
      %1272 = vmatprep.mubr.bf16.mxu0 0
      %1273 = vmatmul.mubr.bf16.gmra.mxu0 %v251
      %v1274 = vpop.f32.mrf.mxu0
      %v1275 = vadd.f32 0.0, %v1274
      %v1276 = vpop.f32.mrf.mxu0
      %v1277 = vpop.f32.mrf.mxu0
      %v1278 = vadd.f32 0.0, %v1277
      %v1279 = vpop.f32.mrf.mxu0
      %1280 = vmatprep.mubr.bf16.mxu0 0
      %1281 = vmatmul.mubr.bf16.gmra.mxu0 %v252
      %v1282 = vpop.f32.mrf.mxu0
      %v1283 = vadd.f32 0.0, %v1282
      %v1284 = vpop.f32.mrf.mxu0
      %v1285 = vpop.f32.mrf.mxu0
      %v1286 = vadd.f32 0.0, %v1285
      %v1287 = vpop.f32.mrf.mxu0
      %1288 = vmatprep.mubr.bf16.mxu0 0
      %1289 = vmatmul.mubr.bf16.gmra.mxu0 %v253
      %v1290 = vpop.f32.mrf.mxu0
      %v1291 = vadd.f32 0.0, %v1290
      %v1292 = vpop.f32.mrf.mxu0
      %v1293 = vpop.f32.mrf.mxu0
      %v1294 = vadd.f32 0.0, %v1293
      %v1295 = vpop.f32.mrf.mxu0
      %1296 = vdwg.mxu0
      %v1313 = vunpack.c.l.b16 %v1005
      %v1314 = vunpack.c.l.b16 %v1006
      %v1315 = vunpack.c.l.b16 %v1007
      %v1316 = vunpack.c.l.b16 %v1008
      %v1317 = vunpack.c.l.b16 %v1009
      %v1318 = vunpack.c.l.b16 %v1010
      %v1319 = vunpack.c.l.b16 %v1011
      %v1320 = vunpack.c.l.b16 %v1012
      %v1321 = vunpack.c.l.b16 %v1013
      %v1322 = vunpack.c.l.b16 %v1014
      %v1323 = vunpack.c.l.b16 %v1015
      %v1324 = vunpack.c.l.b16 %v1016
      %v1325 = vunpack.c.l.b16 %v1017
      %v1326 = vunpack.c.l.b16 %v1018
      %v1327 = vunpack.c.l.b16 %v1019
      %v1328 = vunpack.c.l.b16 %v1020
      %v1329 = vpack.c.b16 %v1314, %v1313
      %v1330 = vpack.c.b16 %v1316, %v1315
      %v1331 = vpack.c.b16 %v1318, %v1317
      %v1332 = vpack.c.b16 %v1320, %v1319
      %v1333 = vpack.c.b16 %v1322, %v1321
      %v1334 = vpack.c.b16 %v1324, %v1323
      %v1335 = vpack.c.b16 %v1326, %v1325
      %v1336 = vpack.c.b16 %v1328, %v1327
      %1345 = vmatprep.subr.bf16.mxu0 0
      %1346 = vmatpush1.bf16.msra.mxu0 %v1336
      %1347 = vmatprep.subr.bf16.mxu0 0
      %1348 = vmatpush1.bf16.msra.mxu0 %v1335
      %1349 = vmatprep.subr.bf16.mxu0 0
      %1350 = vmatpush1.bf16.msra.mxu0 %v1334
      %1351 = vmatprep.subr.bf16.mxu0 0
      %1352 = vmatpush1.bf16.msra.mxu0 %v1333
      %1353 = vmatprep.subr.bf16.mxu0 0
      %1354 = vmatpush1.bf16.msra.mxu0 %v1332
      %1355 = vmatprep.subr.bf16.mxu0 0
      %1356 = vmatpush1.bf16.msra.mxu0 %v1331
      %1357 = vmatprep.subr.bf16.mxu0 0
      %1358 = vmatpush1.bf16.msra.mxu0 %v1330
      %1359 = vmatprep.subr.bf16.mxu0 0
      %1360 = vmatpush1.bf16.msra.mxu0 %v1329
      %1361 = vmatprep.subr.bf16.mxu0 0
      %1362 = vmatpush2.bf16.msra.mxu0 0
      %1363 = vmatprep.subr.bf16.mxu0 0
      %1364 = vmatpush2.bf16.msra.mxu0 0
      %1365 = vmatprep.subr.bf16.mxu0 0
      %1366 = vmatpush2.bf16.msra.mxu0 0
      %1367 = vmatprep.subr.bf16.mxu0 0
      %1368 = vmatpush2.bf16.msra.mxu0 0
      %1369 = vmatprep.subr.bf16.mxu0 0
      %1370 = vmatpush2.bf16.msra.mxu0 0
      %1371 = vmatprep.subr.bf16.mxu0 0
      %1372 = vmatpush2.bf16.msra.mxu0 0
      %1373 = vmatprep.subr.bf16.mxu0 0
      %1374 = vmatpush2.bf16.msra.mxu0 0
      %1375 = vmatprep.subr.bf16.mxu0 0
      %1376 = vmatpush2.bf16.msra.mxu0 0
      %1377 = vmatprep.mubr.bf16.mxu0 0
      %1378 = vmatmul.mubr.bf16.gmra.mxu0 %v1039
      %v1379 = vpop.f32.mrf.mxu0
      %v1380 = vadd.f32 %v1235, %v1379
      %v1381 = vpop.f32.mrf.mxu0
      %v1382 = vpop.f32.mrf.mxu0
      %v1383 = vadd.f32 %v1238, %v1382
      %v1384 = vpop.f32.mrf.mxu0
      %1385 = vmatprep.mubr.bf16.mxu0 0
      %1386 = vmatmul.mubr.bf16.gmra.mxu0 %v1040
      %v1387 = vpop.f32.mrf.mxu0
      %v1388 = vadd.f32 %v1243, %v1387
      %v1389 = vpop.f32.mrf.mxu0
      %v1390 = vpop.f32.mrf.mxu0
      %v1391 = vadd.f32 %v1246, %v1390
      %v1392 = vpop.f32.mrf.mxu0
      %1393 = vmatprep.mubr.bf16.mxu0 0
      %1394 = vmatmul.mubr.bf16.gmra.mxu0 %v1041
      %v1395 = vpop.f32.mrf.mxu0
      %v1396 = vadd.f32 %v1251, %v1395
      %v1397 = vpop.f32.mrf.mxu0
      %v1398 = vpop.f32.mrf.mxu0
      %v1399 = vadd.f32 %v1254, %v1398
      %v1400 = vpop.f32.mrf.mxu0
      %1401 = vmatprep.mubr.bf16.mxu0 0
      %1402 = vmatmul.mubr.bf16.gmra.mxu0 %v1042
      %v1403 = vpop.f32.mrf.mxu0
      %v1404 = vadd.f32 %v1259, %v1403
      %v1405 = vpop.f32.mrf.mxu0
      %v1406 = vpop.f32.mrf.mxu0
      %v1407 = vadd.f32 %v1262, %v1406
      %v1408 = vpop.f32.mrf.mxu0
      %1409 = vmatprep.mubr.bf16.mxu0 0
      %1410 = vmatmul.mubr.bf16.gmra.mxu0 %v1043
      %v1411 = vpop.f32.mrf.mxu0
      %v1412 = vadd.f32 %v1267, %v1411
      %v1413 = vpop.f32.mrf.mxu0
      %v1414 = vpop.f32.mrf.mxu0
      %v1415 = vadd.f32 %v1270, %v1414
      %v1416 = vpop.f32.mrf.mxu0
      %1417 = vmatprep.mubr.bf16.mxu0 0
      %1418 = vmatmul.mubr.bf16.gmra.mxu0 %v1044
      %v1419 = vpop.f32.mrf.mxu0
      %v1420 = vadd.f32 %v1275, %v1419
      %v1421 = vpop.f32.mrf.mxu0
      %v1422 = vpop.f32.mrf.mxu0
      %v1423 = vadd.f32 %v1278, %v1422
      %v1424 = vpop.f32.mrf.mxu0
      %1425 = vmatprep.mubr.bf16.mxu0 0
      %1426 = vmatmul.mubr.bf16.gmra.mxu0 %v1045
      %v1427 = vpop.f32.mrf.mxu0
      %v1428 = vadd.f32 %v1283, %v1427
      %v1429 = vpop.f32.mrf.mxu0
      %v1430 = vpop.f32.mrf.mxu0
      %v1431 = vadd.f32 %v1286, %v1430
      %v1432 = vpop.f32.mrf.mxu0
      %1433 = vmatprep.mubr.bf16.mxu0 0
      %1434 = vmatmul.mubr.bf16.gmra.mxu0 %v1046
      %v1435 = vpop.f32.mrf.mxu0
      %v1436 = vadd.f32 %v1291, %v1435
      %v1437 = vpop.f32.mrf.mxu0
      %v1438 = vpop.f32.mrf.mxu0
      %v1439 = vadd.f32 %v1294, %v1438
      %v1440 = vpop.f32.mrf.mxu0
      %1441 = vdwg.mxu0
      %v1443 = vlaneseq
      %v1444 = vshrl.u32 %v1443, 7
      %v1445 = vsub.s32 0, %v1444
      %v1446 = vrot.slane %v1038, %v1445
      %v1448 = vadd.f32 %v1380, %v1446
      %v1449 = vadd.f32 %v1383, %v1446
      %v1450 = vadd.f32 %v1388, %v1446
      %v1451 = vadd.f32 %v1391, %v1446
      %v1452 = vadd.f32 %v1396, %v1446
      %v1453 = vadd.f32 %v1399, %v1446
      %v1454 = vadd.f32 %v1404, %v1446
      %v1455 = vadd.f32 %v1407, %v1446
      %v1456 = vadd.f32 %v1412, %v1446
      %v1457 = vadd.f32 %v1415, %v1446
      %v1458 = vadd.f32 %v1420, %v1446
      %v1459 = vadd.f32 %v1423, %v1446
      %v1460 = vadd.f32 %v1428, %v1446
      %v1461 = vadd.f32 %v1431, %v1446
      %v1462 = vadd.f32 %v1436, %v1446
      %v1463 = vadd.f32 %v1439, %v1446
      %v1464 = vmax.f32 %v1448, 0.0
      %v1465 = vmax.f32 %v1449, 0.0
      %v1466 = vmax.f32 %v1450, 0.0
      %v1467 = vmax.f32 %v1451, 0.0
      %v1468 = vmax.f32 %v1452, 0.0
      %v1469 = vmax.f32 %v1453, 0.0
      %v1470 = vmax.f32 %v1454, 0.0
      %v1471 = vmax.f32 %v1455, 0.0
      %v1472 = vmax.f32 %v1456, 0.0
      %v1473 = vmax.f32 %v1457, 0.0
      %v1474 = vmax.f32 %v1458, 0.0
      %v1475 = vmax.f32 %v1459, 0.0
      %v1476 = vmax.f32 %v1460, 0.0
      %v1477 = vmax.f32 %v1461, 0.0
      %v1478 = vmax.f32 %v1462, 0.0
      %v1479 = vmax.f32 %v1463, 0.0
      %v1480 = vadd.f32 %v506, %v1464
      %v1481 = vadd.f32 %v507, %v1465
      %v1482 = vadd.f32 %v508, %v1466
      %v1483 = vadd.f32 %v509, %v1467
      %v1484 = vadd.f32 %v510, %v1468
      %v1485 = vadd.f32 %v511, %v1469
      %v1486 = vadd.f32 %v512, %v1470
      %v1487 = vadd.f32 %v513, %v1471
      %v1488 = vadd.f32 %v514, %v1472
      %v1489 = vadd.f32 %v515, %v1473
      %v1490 = vadd.f32 %v516, %v1474
      %v1491 = vadd.f32 %v517, %v1475
      %v1492 = vadd.f32 %v518, %v1476
      %v1493 = vadd.f32 %v519, %v1477
      %v1494 = vadd.f32 %v520, %v1478
      %v1495 = vadd.f32 %v521, %v1479
      %v1496 = vmul.f32 %v1480, 0.5
      %v1497 = vmul.f32 %v1481, 0.5
      %v1498 = vmul.f32 %v1482, 0.5
      %v1499 = vmul.f32 %v1483, 0.5
      %v1500 = vmul.f32 %v1484, 0.5
      %v1501 = vmul.f32 %v1485, 0.5
      %v1502 = vmul.f32 %v1486, 0.5
      %v1503 = vmul.f32 %v1487, 0.5
      %v1504 = vmul.f32 %v1488, 0.5
      %v1505 = vmul.f32 %v1489, 0.5
      %v1506 = vmul.f32 %v1490, 0.5
      %v1507 = vmul.f32 %v1491, 0.5
      %v1508 = vmul.f32 %v1492, 0.5
      %v1509 = vmul.f32 %v1493, 0.5
      %v1510 = vmul.f32 %v1494, 0.5
      %v1511 = vmul.f32 %v1495, 0.5
    $region38: #{graph_conv_block.1} parent=1 // loop_footer
      %s505 = sadd.s32 1, %s501
    $region39: #{graph_conv_block.1} parent=1 // loop_footer_branch
      %500 = sbr.rel target = $region35
    $region40: #{graph_conv_block.1} parent=1 // loop_exit
      _
    %v1512 = vld [vmem:[%s6] sm:$0xf]
    %v1513 = vld [vmem:[%s6 + $0x4] sm:$0xf]
    %v1514 = vld [vmem:[%s6 + $0x8] sm:$0xf]
    %v1515 = vld [vmem:[%s6 + $0xc] sm:$0xf]
    %v1516 = vld [vmem:[%s6 + $0x10] sm:$0xf]
    %v1517 = vld [vmem:[%s6 + $0x14] sm:$0xf]
    %v1518 = vld [vmem:[%s6 + $0x18] sm:$0xf]
    %v1519 = vld [vmem:[%s6 + $0x1c] sm:$0xf]
    %v1520 = vld [vmem:[%s6 + $0x20] sm:$0xf]
    %v1521 = vld [vmem:[%s6 + $0x24] sm:$0xf]
    %v1522 = vld [vmem:[%s6 + $0x28] sm:$0xf]
    %v1523 = vld [vmem:[%s6 + $0x2c] sm:$0xf]
    %v1524 = vld [vmem:[%s6 + $0x30] sm:$0xf]
    %v1525 = vld [vmem:[%s6 + $0x34] sm:$0xf]
    %v1526 = vld [vmem:[%s6 + $0x38] sm:$0xf]
    %v1527 = vld [vmem:[%s6 + $0x3c] sm:$0xf]
    %v1528 = vld [vmem:[%s6 + $0x40] sm:$0xf]
    %v1529 = vld [vmem:[%s6 + $0x44] sm:$0xf]
    %v1530 = vld [vmem:[%s6 + $0x48] sm:$0xf]
    %v1531 = vld [vmem:[%s6 + $0x4c] sm:$0xf]
    %v1532 = vld [vmem:[%s6 + $0x50] sm:$0xf]
    %v1533 = vld [vmem:[%s6 + $0x54] sm:$0xf]
    %v1534 = vld [vmem:[%s6 + $0x58] sm:$0xf]
    %v1535 = vld [vmem:[%s6 + $0x5c] sm:$0xf]
    %v1536 = vld [vmem:[%s6 + $0x60] sm:$0xf]
    %v1537 = vld [vmem:[%s6 + $0x64] sm:$0xf]
    %v1538 = vld [vmem:[%s6 + $0x68] sm:$0xf]
    %v1539 = vld [vmem:[%s6 + $0x6c] sm:$0xf]
    %v1540 = vld [vmem:[%s6 + $0x70] sm:$0xf]
    %v1541 = vld [vmem:[%s6 + $0x74] sm:$0xf]
    %v1542 = vld [vmem:[%s6 + $0x78] sm:$0xf]
    %v1543 = vld [vmem:[%s6 + $0x7c] sm:$0xf]
    %v1544 = vld [vmem:[%s7] sm:$0x1]
    %v1545 = vpack.c.bf16 %v507, %v506
    %v1546 = vpack.c.bf16 %v509, %v508
    %v1547 = vpack.c.bf16 %v511, %v510
    %v1548 = vpack.c.bf16 %v513, %v512
    %v1549 = vpack.c.bf16 %v515, %v514
    %v1550 = vpack.c.bf16 %v517, %v516
    %v1551 = vpack.c.bf16 %v519, %v518
    %v1552 = vpack.c.bf16 %v521, %v520
    %v1569 = vunpack.c.l.b16 %v1528
    %v1570 = vunpack.c.l.b16 %v1529
    %v1571 = vunpack.c.l.b16 %v1530
    %v1572 = vunpack.c.l.b16 %v1531
    %v1573 = vunpack.c.l.b16 %v1532
    %v1574 = vunpack.c.l.b16 %v1533
    %v1575 = vunpack.c.l.b16 %v1534
    %v1576 = vunpack.c.l.b16 %v1535
    %v1577 = vunpack.c.l.b16 %v1536
    %v1578 = vunpack.c.l.b16 %v1537
    %v1579 = vunpack.c.l.b16 %v1538
    %v1580 = vunpack.c.l.b16 %v1539
    %v1581 = vunpack.c.l.b16 %v1540
    %v1582 = vunpack.c.l.b16 %v1541
    %v1583 = vunpack.c.l.b16 %v1542
    %v1584 = vunpack.c.l.b16 %v1543
    %v1585 = vpack.c.b16 %v1570, %v1569
    %v1586 = vpack.c.b16 %v1572, %v1571
    %v1587 = vpack.c.b16 %v1574, %v1573
    %v1588 = vpack.c.b16 %v1576, %v1575
    %v1589 = vpack.c.b16 %v1578, %v1577
    %v1590 = vpack.c.b16 %v1580, %v1579
    %v1591 = vpack.c.b16 %v1582, %v1581
    %v1592 = vpack.c.b16 %v1584, %v1583
    %1601 = vmatprep.subr.bf16.mxu0 0
    %1602 = vmatpush1.bf16.msra.mxu0 %v1592
    %1603 = vmatprep.subr.bf16.mxu0 0
    %1604 = vmatpush1.bf16.msra.mxu0 %v1591
    %1605 = vmatprep.subr.bf16.mxu0 0
    %1606 = vmatpush1.bf16.msra.mxu0 %v1590
    %1607 = vmatprep.subr.bf16.mxu0 0
    %1608 = vmatpush1.bf16.msra.mxu0 %v1589
    %1609 = vmatprep.subr.bf16.mxu0 0
    %1610 = vmatpush1.bf16.msra.mxu0 %v1588
    %1611 = vmatprep.subr.bf16.mxu0 0
    %1612 = vmatpush1.bf16.msra.mxu0 %v1587
    %1613 = vmatprep.subr.bf16.mxu0 0
    %1614 = vmatpush1.bf16.msra.mxu0 %v1586
    %1615 = vmatprep.subr.bf16.mxu0 0
    %1616 = vmatpush1.bf16.msra.mxu0 %v1585
    %1617 = vmatprep.subr.bf16.mxu0 0
    %1618 = vmatpush2.bf16.msra.mxu0 0
    %1619 = vmatprep.subr.bf16.mxu0 0
    %1620 = vmatpush2.bf16.msra.mxu0 0
    %1621 = vmatprep.subr.bf16.mxu0 0
    %1622 = vmatpush2.bf16.msra.mxu0 0
    %1623 = vmatprep.subr.bf16.mxu0 0
    %1624 = vmatpush2.bf16.msra.mxu0 0
    %1625 = vmatprep.subr.bf16.mxu0 0
    %1626 = vmatpush2.bf16.msra.mxu0 0
    %1627 = vmatprep.subr.bf16.mxu0 0
    %1628 = vmatpush2.bf16.msra.mxu0 0
    %1629 = vmatprep.subr.bf16.mxu0 0
    %1630 = vmatpush2.bf16.msra.mxu0 0
    %1631 = vmatprep.subr.bf16.mxu0 0
    %1632 = vmatpush2.bf16.msra.mxu0 0
    %1633 = vmatprep.mubr.bf16.mxu0 0
    %1634 = vmatmul.mubr.bf16.gmra.mxu0 %v1545
    %v1635 = vpop.f32.mrf.mxu0
    %v1636 = vadd.f32 0.0, %v1635
    %v1637 = vpop.f32.mrf.mxu0
    %v1638 = vpop.f32.mrf.mxu0
    %v1639 = vadd.f32 0.0, %v1638
    %v1640 = vpop.f32.mrf.mxu0
    %1641 = vmatprep.mubr.bf16.mxu0 0
    %1642 = vmatmul.mubr.bf16.gmra.mxu0 %v1546
    %v1643 = vpop.f32.mrf.mxu0
    %v1644 = vadd.f32 0.0, %v1643
    %v1645 = vpop.f32.mrf.mxu0
    %v1646 = vpop.f32.mrf.mxu0
    %v1647 = vadd.f32 0.0, %v1646
    %v1648 = vpop.f32.mrf.mxu0
    %1649 = vmatprep.mubr.bf16.mxu0 0
    %1650 = vmatmul.mubr.bf16.gmra.mxu0 %v1547
    %v1651 = vpop.f32.mrf.mxu0
    %v1652 = vadd.f32 0.0, %v1651
    %v1653 = vpop.f32.mrf.mxu0
    %v1654 = vpop.f32.mrf.mxu0
    %v1655 = vadd.f32 0.0, %v1654
    %v1656 = vpop.f32.mrf.mxu0
    %1657 = vmatprep.mubr.bf16.mxu0 0
    %1658 = vmatmul.mubr.bf16.gmra.mxu0 %v1548
    %v1659 = vpop.f32.mrf.mxu0
    %v1660 = vadd.f32 0.0, %v1659
    %v1661 = vpop.f32.mrf.mxu0
    %v1662 = vpop.f32.mrf.mxu0
    %v1663 = vadd.f32 0.0, %v1662
    %v1664 = vpop.f32.mrf.mxu0
    %1665 = vmatprep.mubr.bf16.mxu0 0
    %1666 = vmatmul.mubr.bf16.gmra.mxu0 %v1549
    %v1667 = vpop.f32.mrf.mxu0
    %v1668 = vadd.f32 0.0, %v1667
    %v1669 = vpop.f32.mrf.mxu0
    %v1670 = vpop.f32.mrf.mxu0
    %v1671 = vadd.f32 0.0, %v1670
    %v1672 = vpop.f32.mrf.mxu0
    %1673 = vmatprep.mubr.bf16.mxu0 0
    %1674 = vmatmul.mubr.bf16.gmra.mxu0 %v1550
    %v1675 = vpop.f32.mrf.mxu0
    %v1676 = vadd.f32 0.0, %v1675
    %v1677 = vpop.f32.mrf.mxu0
    %v1678 = vpop.f32.mrf.mxu0
    %v1679 = vadd.f32 0.0, %v1678
    %v1680 = vpop.f32.mrf.mxu0
    %1681 = vmatprep.mubr.bf16.mxu0 0
    %1682 = vmatmul.mubr.bf16.gmra.mxu0 %v1551
    %v1683 = vpop.f32.mrf.mxu0
    %v1684 = vadd.f32 0.0, %v1683
    %v1685 = vpop.f32.mrf.mxu0
    %v1686 = vpop.f32.mrf.mxu0
    %v1687 = vadd.f32 0.0, %v1686
    %v1688 = vpop.f32.mrf.mxu0
    %1689 = vmatprep.mubr.bf16.mxu0 0
    %1690 = vmatmul.mubr.bf16.gmra.mxu0 %v1552
    %v1691 = vpop.f32.mrf.mxu0
    %v1692 = vadd.f32 0.0, %v1691
    %v1693 = vpop.f32.mrf.mxu0
    %v1694 = vpop.f32.mrf.mxu0
    %v1695 = vadd.f32 0.0, %v1694
    %v1696 = vpop.f32.mrf.mxu0
    %1697 = vdwg.mxu0
    %v1698 = vpack.c.bf16 %v1639, %v1636
    %v1699 = vpack.c.bf16 %v1647, %v1644
    %v1700 = vpack.c.bf16 %v1655, %v1652
    %v1701 = vpack.c.bf16 %v1663, %v1660
    %v1702 = vpack.c.bf16 %v1671, %v1668
    %v1703 = vpack.c.bf16 %v1679, %v1676
    %v1704 = vpack.c.bf16 %v1687, %v1684
    %v1705 = vpack.c.bf16 %v1695, %v1692
    %1706 = vmatprep.subr.bf16.mxu0 0
    %1707 = vmatpush1.bf16.msra.mxu0 %v1705
    %1708 = vmatprep.subr.bf16.mxu0 0
    %1709 = vmatpush1.bf16.msra.mxu0 %v1704
    %1710 = vmatprep.subr.bf16.mxu0 0
    %1711 = vmatpush1.bf16.msra.mxu0 %v1703
    %1712 = vmatprep.subr.bf16.mxu0 0
    %1713 = vmatpush1.bf16.msra.mxu0 %v1702
    %1714 = vmatprep.subr.bf16.mxu0 0
    %1715 = vmatpush1.bf16.msra.mxu0 %v1701
    %1716 = vmatprep.subr.bf16.mxu0 0
    %1717 = vmatpush1.bf16.msra.mxu0 %v1700
    %1718 = vmatprep.subr.bf16.mxu0 0
    %1719 = vmatpush1.bf16.msra.mxu0 %v1699
    %1720 = vmatprep.subr.bf16.mxu0 0
    %1721 = vmatpush1.bf16.msra.mxu0 %v1698
    %1722 = vmatprep.subr.bf16.mxu0 0
    %1723 = vmatpush2.bf16.msra.mxu0 0
    %1724 = vmatprep.subr.bf16.mxu0 0
    %1725 = vmatpush2.bf16.msra.mxu0 0
    %1726 = vmatprep.subr.bf16.mxu0 0
    %1727 = vmatpush2.bf16.msra.mxu0 0
    %1728 = vmatprep.subr.bf16.mxu0 0
    %1729 = vmatpush2.bf16.msra.mxu0 0
    %1730 = vmatprep.subr.bf16.mxu0 0
    %1731 = vmatpush2.bf16.msra.mxu0 0
    %1732 = vmatprep.subr.bf16.mxu0 0
    %1733 = vmatpush2.bf16.msra.mxu0 0
    %1734 = vmatprep.subr.bf16.mxu0 0
    %1735 = vmatpush2.bf16.msra.mxu0 0
    %1736 = vmatprep.subr.bf16.mxu0 0
    %1737 = vmatpush2.bf16.msra.mxu0 0
    %1738 = vmatprep.mubr.bf16.mxu0 0
    %1739 = vmatmul.mubr.bf16.gmra.mxu0 %v246
    %v1740 = vpop.f32.mrf.mxu0
    %v1741 = vadd.f32 0.0, %v1740
    %v1742 = vpop.f32.mrf.mxu0
    %v1743 = vpop.f32.mrf.mxu0
    %v1744 = vadd.f32 0.0, %v1743
    %v1745 = vpop.f32.mrf.mxu0
    %1746 = vmatprep.mubr.bf16.mxu0 0
    %1747 = vmatmul.mubr.bf16.gmra.mxu0 %v247
    %v1748 = vpop.f32.mrf.mxu0
    %v1749 = vadd.f32 0.0, %v1748
    %v1750 = vpop.f32.mrf.mxu0
    %v1751 = vpop.f32.mrf.mxu0
    %v1752 = vadd.f32 0.0, %v1751
    %v1753 = vpop.f32.mrf.mxu0
    %1754 = vmatprep.mubr.bf16.mxu0 0
    %1755 = vmatmul.mubr.bf16.gmra.mxu0 %v248
    %v1756 = vpop.f32.mrf.mxu0
    %v1757 = vadd.f32 0.0, %v1756
    %v1758 = vpop.f32.mrf.mxu0
    %v1759 = vpop.f32.mrf.mxu0
    %v1760 = vadd.f32 0.0, %v1759
    %v1761 = vpop.f32.mrf.mxu0
    %1762 = vmatprep.mubr.bf16.mxu0 0
    %1763 = vmatmul.mubr.bf16.gmra.mxu0 %v249
    %v1764 = vpop.f32.mrf.mxu0
    %v1765 = vadd.f32 0.0, %v1764
    %v1766 = vpop.f32.mrf.mxu0
    %v1767 = vpop.f32.mrf.mxu0
    %v1768 = vadd.f32 0.0, %v1767
    %v1769 = vpop.f32.mrf.mxu0
    %1770 = vmatprep.mubr.bf16.mxu0 0
    %1771 = vmatmul.mubr.bf16.gmra.mxu0 %v250
    %v1772 = vpop.f32.mrf.mxu0
    %v1773 = vadd.f32 0.0, %v1772
    %v1774 = vpop.f32.mrf.mxu0
    %v1775 = vpop.f32.mrf.mxu0
    %v1776 = vadd.f32 0.0, %v1775
    %v1777 = vpop.f32.mrf.mxu0
    %1778 = vmatprep.mubr.bf16.mxu0 0
    %1779 = vmatmul.mubr.bf16.gmra.mxu0 %v251
    %v1780 = vpop.f32.mrf.mxu0
    %v1781 = vadd.f32 0.0, %v1780
    %v1782 = vpop.f32.mrf.mxu0
    %v1783 = vpop.f32.mrf.mxu0
    %v1784 = vadd.f32 0.0, %v1783
    %v1785 = vpop.f32.mrf.mxu0
    %1786 = vmatprep.mubr.bf16.mxu0 0
    %1787 = vmatmul.mubr.bf16.gmra.mxu0 %v252
    %v1788 = vpop.f32.mrf.mxu0
    %v1789 = vadd.f32 0.0, %v1788
    %v1790 = vpop.f32.mrf.mxu0
    %v1791 = vpop.f32.mrf.mxu0
    %v1792 = vadd.f32 0.0, %v1791
    %v1793 = vpop.f32.mrf.mxu0
    %1794 = vmatprep.mubr.bf16.mxu0 0
    %1795 = vmatmul.mubr.bf16.gmra.mxu0 %v253
    %v1796 = vpop.f32.mrf.mxu0
    %v1797 = vadd.f32 0.0, %v1796
    %v1798 = vpop.f32.mrf.mxu0
    %v1799 = vpop.f32.mrf.mxu0
    %v1800 = vadd.f32 0.0, %v1799
    %v1801 = vpop.f32.mrf.mxu0
    %1802 = vdwg.mxu0
    %v1819 = vunpack.c.l.b16 %v1512
    %v1820 = vunpack.c.l.b16 %v1513
    %v1821 = vunpack.c.l.b16 %v1514
    %v1822 = vunpack.c.l.b16 %v1515
    %v1823 = vunpack.c.l.b16 %v1516
    %v1824 = vunpack.c.l.b16 %v1517
    %v1825 = vunpack.c.l.b16 %v1518
    %v1826 = vunpack.c.l.b16 %v1519
    %v1827 = vunpack.c.l.b16 %v1520
    %v1828 = vunpack.c.l.b16 %v1521
    %v1829 = vunpack.c.l.b16 %v1522
    %v1830 = vunpack.c.l.b16 %v1523
    %v1831 = vunpack.c.l.b16 %v1524
    %v1832 = vunpack.c.l.b16 %v1525
    %v1833 = vunpack.c.l.b16 %v1526
    %v1834 = vunpack.c.l.b16 %v1527
    %v1835 = vpack.c.b16 %v1820, %v1819
    %v1836 = vpack.c.b16 %v1822, %v1821
    %v1837 = vpack.c.b16 %v1824, %v1823
    %v1838 = vpack.c.b16 %v1826, %v1825
    %v1839 = vpack.c.b16 %v1828, %v1827
    %v1840 = vpack.c.b16 %v1830, %v1829
    %v1841 = vpack.c.b16 %v1832, %v1831
    %v1842 = vpack.c.b16 %v1834, %v1833
    %1851 = vmatprep.subr.bf16.mxu0 0
    %1852 = vmatpush1.bf16.msra.mxu0 %v1842
    %1853 = vmatprep.subr.bf16.mxu0 0
    %1854 = vmatpush1.bf16.msra.mxu0 %v1841
    %1855 = vmatprep.subr.bf16.mxu0 0
    %1856 = vmatpush1.bf16.msra.mxu0 %v1840
    %1857 = vmatprep.subr.bf16.mxu0 0
    %1858 = vmatpush1.bf16.msra.mxu0 %v1839
    %1859 = vmatprep.subr.bf16.mxu0 0
    %1860 = vmatpush1.bf16.msra.mxu0 %v1838
    %1861 = vmatprep.subr.bf16.mxu0 0
    %1862 = vmatpush1.bf16.msra.mxu0 %v1837
    %1863 = vmatprep.subr.bf16.mxu0 0
    %1864 = vmatpush1.bf16.msra.mxu0 %v1836
    %1865 = vmatprep.subr.bf16.mxu0 0
    %1866 = vmatpush1.bf16.msra.mxu0 %v1835
    %1867 = vmatprep.subr.bf16.mxu0 0
    %1868 = vmatpush2.bf16.msra.mxu0 0
    %1869 = vmatprep.subr.bf16.mxu0 0
    %1870 = vmatpush2.bf16.msra.mxu0 0
    %1871 = vmatprep.subr.bf16.mxu0 0
    %1872 = vmatpush2.bf16.msra.mxu0 0
    %1873 = vmatprep.subr.bf16.mxu0 0
    %1874 = vmatpush2.bf16.msra.mxu0 0
    %1875 = vmatprep.subr.bf16.mxu0 0
    %1876 = vmatpush2.bf16.msra.mxu0 0
    %1877 = vmatprep.subr.bf16.mxu0 0
    %1878 = vmatpush2.bf16.msra.mxu0 0
    %1879 = vmatprep.subr.bf16.mxu0 0
    %1880 = vmatpush2.bf16.msra.mxu0 0
    %1881 = vmatprep.subr.bf16.mxu0 0
    %1882 = vmatpush2.bf16.msra.mxu0 0
    %1883 = vmatprep.mubr.bf16.mxu0 0
    %1884 = vmatmul.mubr.bf16.gmra.mxu0 %v1545
    %v1885 = vpop.f32.mrf.mxu0
    %v1886 = vadd.f32 %v1741, %v1885
    %v1887 = vpop.f32.mrf.mxu0
    %v1888 = vpop.f32.mrf.mxu0
    %v1889 = vadd.f32 %v1744, %v1888
    %v1890 = vpop.f32.mrf.mxu0
    %1891 = vmatprep.mubr.bf16.mxu0 0
    %1892 = vmatmul.mubr.bf16.gmra.mxu0 %v1546
    %v1893 = vpop.f32.mrf.mxu0
    %v1894 = vadd.f32 %v1749, %v1893
    %v1895 = vpop.f32.mrf.mxu0
    %v1896 = vpop.f32.mrf.mxu0
    %v1897 = vadd.f32 %v1752, %v1896
    %v1898 = vpop.f32.mrf.mxu0
    %1899 = vmatprep.mubr.bf16.mxu0 0
    %1900 = vmatmul.mubr.bf16.gmra.mxu0 %v1547
    %v1901 = vpop.f32.mrf.mxu0
    %v1902 = vadd.f32 %v1757, %v1901
    %v1903 = vpop.f32.mrf.mxu0
    %v1904 = vpop.f32.mrf.mxu0
    %v1905 = vadd.f32 %v1760, %v1904
    %v1906 = vpop.f32.mrf.mxu0
    %1907 = vmatprep.mubr.bf16.mxu0 0
    %1908 = vmatmul.mubr.bf16.gmra.mxu0 %v1548
    %v1909 = vpop.f32.mrf.mxu0
    %v1910 = vadd.f32 %v1765, %v1909
    %v1911 = vpop.f32.mrf.mxu0
    %v1912 = vpop.f32.mrf.mxu0
    %v1913 = vadd.f32 %v1768, %v1912
    %v1914 = vpop.f32.mrf.mxu0
    %1915 = vmatprep.mubr.bf16.mxu0 0
    %1916 = vmatmul.mubr.bf16.gmra.mxu0 %v1549
    %v1917 = vpop.f32.mrf.mxu0
    %v1918 = vadd.f32 %v1773, %v1917
    %v1919 = vpop.f32.mrf.mxu0
    %v1920 = vpop.f32.mrf.mxu0
    %v1921 = vadd.f32 %v1776, %v1920
    %v1922 = vpop.f32.mrf.mxu0
    %1923 = vmatprep.mubr.bf16.mxu0 0
    %1924 = vmatmul.mubr.bf16.gmra.mxu0 %v1550
    %v1925 = vpop.f32.mrf.mxu0
    %v1926 = vadd.f32 %v1781, %v1925
    %v1927 = vpop.f32.mrf.mxu0
    %v1928 = vpop.f32.mrf.mxu0
    %v1929 = vadd.f32 %v1784, %v1928
    %v1930 = vpop.f32.mrf.mxu0
    %1931 = vmatprep.mubr.bf16.mxu0 0
    %1932 = vmatmul.mubr.bf16.gmra.mxu0 %v1551
    %v1933 = vpop.f32.mrf.mxu0
    %v1934 = vadd.f32 %v1789, %v1933
    %v1935 = vpop.f32.mrf.mxu0
    %v1936 = vpop.f32.mrf.mxu0
    %v1937 = vadd.f32 %v1792, %v1936
    %v1938 = vpop.f32.mrf.mxu0
    %1939 = vmatprep.mubr.bf16.mxu0 0
    %1940 = vmatmul.mubr.bf16.gmra.mxu0 %v1552
    %v1941 = vpop.f32.mrf.mxu0
    %v1942 = vadd.f32 %v1797, %v1941
    %v1943 = vpop.f32.mrf.mxu0
    %v1944 = vpop.f32.mrf.mxu0
    %v1945 = vadd.f32 %v1800, %v1944
    %v1946 = vpop.f32.mrf.mxu0
    %1947 = vdwg.mxu0
    %v1949 = vlaneseq
    %v1950 = vshrl.u32 %v1949, 7
    %v1951 = vsub.s32 0, %v1950
    %v1952 = vrot.slane %v1544, %v1951
    %v1954 = vadd.f32 %v1886, %v1952
    %v1955 = vadd.f32 %v1889, %v1952
    %v1956 = vadd.f32 %v1894, %v1952
    %v1957 = vadd.f32 %v1897, %v1952
    %v1958 = vadd.f32 %v1902, %v1952
    %v1959 = vadd.f32 %v1905, %v1952
    %v1960 = vadd.f32 %v1910, %v1952
    %v1961 = vadd.f32 %v1913, %v1952
    %v1962 = vadd.f32 %v1918, %v1952
    %v1963 = vadd.f32 %v1921, %v1952
    %v1964 = vadd.f32 %v1926, %v1952
    %v1965 = vadd.f32 %v1929, %v1952
    %v1966 = vadd.f32 %v1934, %v1952
    %v1967 = vadd.f32 %v1937, %v1952
    %v1968 = vadd.f32 %v1942, %v1952
    %v1969 = vadd.f32 %v1945, %v1952
    %1970 = vst [vmem:[#allocation2] sm:$0xff] %v506
    %1971 = vst [vmem:[#allocation2 + $0x8] sm:$0xff] %v507
    %1972 = vst [vmem:[#allocation2 + $0x10] sm:$0xff] %v508
    %1973 = vst [vmem:[#allocation2 + $0x18] sm:$0xff] %v509
    %1974 = vst [vmem:[#allocation2 + $0x20] sm:$0xff] %v510
    %1975 = vst [vmem:[#allocation2 + $0x28] sm:$0xff] %v511
    %1976 = vst [vmem:[#allocation2 + $0x30] sm:$0xff] %v512
    %1977 = vst [vmem:[#allocation2 + $0x38] sm:$0xff] %v513
    %1978 = vst [vmem:[#allocation2 + $0x40] sm:$0xff] %v514
    %1979 = vst [vmem:[#allocation2 + $0x48] sm:$0xff] %v515
    %1980 = vst [vmem:[#allocation2 + $0x50] sm:$0xff] %v516
    %1981 = vst [vmem:[#allocation2 + $0x58] sm:$0xff] %v517
    %1982 = vst [vmem:[#allocation2 + $0x60] sm:$0xff] %v518
    %1983 = vst [vmem:[#allocation2 + $0x68] sm:$0xff] %v519
    %1984 = vst [vmem:[#allocation2 + $0x70] sm:$0xff] %v520
    %1985 = vst [vmem:[#allocation2 + $0x78] sm:$0xff] %v521
    %1986 = vst [vmem:[%s8] sm:$0xff] %v1954
    %1987 = vst [vmem:[%s8 + $0x8] sm:$0xff] %v1955
    %1988 = vst [vmem:[%s8 + $0x10] sm:$0xff] %v1956
    %1989 = vst [vmem:[%s8 + $0x18] sm:$0xff] %v1957
    %1990 = vst [vmem:[%s8 + $0x20] sm:$0xff] %v1958
    %1991 = vst [vmem:[%s8 + $0x28] sm:$0xff] %v1959
    %1992 = vst [vmem:[%s8 + $0x30] sm:$0xff] %v1960
    %1993 = vst [vmem:[%s8 + $0x38] sm:$0xff] %v1961
    %1994 = vst [vmem:[%s8 + $0x40] sm:$0xff] %v1962
    %1995 = vst [vmem:[%s8 + $0x48] sm:$0xff] %v1963
    %1996 = vst [vmem:[%s8 + $0x50] sm:$0xff] %v1964
    %1997 = vst [vmem:[%s8 + $0x58] sm:$0xff] %v1965
    %1998 = vst [vmem:[%s8 + $0x60] sm:$0xff] %v1966
    %1999 = vst [vmem:[%s8 + $0x68] sm:$0xff] %v1967
    %2000 = vst [vmem:[%s8 + $0x70] sm:$0xff] %v1968
    %2001 = vst [vmem:[%s8 + $0x78] sm:$0xff] %v1969
    // Predicated region
    $region41: #{graph_conv_block.1} parent=1 // pred_check
      _
    $region42: #{graph_conv_block.1} parent=1 // pred_check_branch
      %2003 = sbr.rel (0) target = $region44
    $region43: #{graph_conv_block.1} parent=1 // pred_region
      _
    $region44: #{graph_conv_block.1} parent=1 // pred_fallthru
      _
    // Predicated region
    $region45: #{graph_conv_block.1} parent=1 // pred_check
      _
    $region46: #{graph_conv_block.1} parent=1 // pred_check_branch
      %2005 = sbr.rel (0) target = $region48
    $region47: #{graph_conv_block.1} parent=1 // pred_region
      %s2007 = ssub.s32 2048, 2048
      %2008 = vsyncadd [#allocation3], %s2007
      %s2009 = sshll.u32 [#allocation2], 4
      %s2010 = int_to_ptr.vmem [resolvable:$true] %s2009
      %2015 = dma.vmem_to_hbm [thread:$0]  %s2010, 2048, %s9, [#allocation3], 128, 128, 8
    $region48: #{graph_conv_block.1} parent=1 // pred_fallthru
      _
    // Predicated region
    $region49: #{graph_conv_block.1} parent=1 // pred_check
      _
    $region50: #{graph_conv_block.1} parent=1 // pred_check_branch
      %2017 = sbr.rel (0) target = $region52
    $region51: #{graph_conv_block.1} parent=1 // pred_region
      _
    $region52: #{graph_conv_block.1} parent=1 // pred_fallthru
      _
    // Predicated region
    $region53: #{graph_conv_block.1} parent=1 // pred_check
      _
    $region54: #{graph_conv_block.1} parent=1 // pred_check_branch
      %2019 = sbr.rel (0) target = $region56
    $region55: #{graph_conv_block.1} parent=1 // pred_region
      %2020 = dma.done [#allocation3], 2048
    $region56: #{graph_conv_block.1} parent=1 // pred_fallthru
      _
    %2021 = vsyncpa [#allocation3], 1

</llo_original>
